<compile_context>
chip_gen: v7x
topology: tpu7x:2x2x1
jax: 0.10.0
libtpu: 0.0.40
codegen_flags: <defaults>
</compile_context>

<pallas_src>
import jax
import jax.numpy as jnp
import numpy as np
from jax import lax
from jax.experimental import pallas as pl
from jax.experimental.pallas import tpu as pltpu  # noqa: F401  (TPU knobs not needed at these sizes)

# ----------------------------- model dims (small, synthetic) -----------------------------
B = 2          # batch
T = 8          # timesteps
R_FEAT = 16    # robot feature dim
O_FEAT = 24    # object feature dim
NUM_ACT = 8    # |ACTIONS|
D = 32         # embedding dim
H = 4 * D      # MLP hidden (128)
S = 2 * T      # interleaved sequence length per batch (16)
N = B * T      # total state tokens == total action tokens (16)
LN_EPS = 1e-5
OUT_PAD = 128  # lane-dense padded logits width

# ------------------- pack_d: width-D row tables (embeddings / LN vectors) -------------------
_WR_OFF    = 0                      # [R_FEAT, D]  robot-state embedding
_WOBJ_OFF  = _WR_OFF + R_FEAT       # [O_FEAT, D]  object-state embedding
_WA_OFF    = _WOBJ_OFF + O_FEAT     # [NUM_ACT, D] action embedding table
_POS_OFF   = _WA_OFF + NUM_ACT      # [2N, D]      batch-tiled positions (+ token-type bias folded in)
_VEC_OFF   = _POS_OFF + 2 * N       # [8, D]       LN gains/biases + MLP down bias
PACKD_ROWS = _VEC_OFF + 8           # 88   (every section 8-row aligned)

_V_G1, _V_B1, _V_G2, _V_B2, _V_G3, _V_B3, _V_BM2 = range(7)

# ------------------- pack_w: width-128 lane-dense MXU weights (8-row aligned) -------------------
_WQKVO_OFF = 0                      # [D, 4D]      (Wq | Wk | Wv | Wo)
_BQKV_OFF  = 32                     # [1, 4D]      (bq | bk | bv | bo)
_W1_OFF    = 40                     # [D, H]       MLP up projection
_BM1_OFF   = 72                     # [1, H]
_W2T_OFF   = 80                     # [D, H]       MLP down projection (transposed)
_WH_OFF    = 112                    # [D, OUT_PAD] action head (cols 0..NUM_ACT-1)
_BH_OFF    = 144                    # [1, OUT_PAD]
PACKW_ROWS = 152


# ----------------------------------- fused kernel -----------------------------------
def dt_fused_kernel(robot_ref,   # VMEM [N, R_FEAT]  f32
                    obj_ref,     # VMEM [N, O_FEAT]  f32
                    act_ref,     # VMEM [N, 1]       int32
                    mask_ref,    # VMEM [2N, 2N]     f32 additive causal+batch mask
                    packd_ref,   # VMEM [PACKD_ROWS, D]
                    packw_ref,   # VMEM [PACKW_ROWS, 128]
                    out_ref):    # VMEM [N, OUT_PAD] f32
    # --- width-D row tables ---
    w_r   = packd_ref[_WR_OFF:_WR_OFF + R_FEAT, :]
    w_obj = packd_ref[_WOBJ_OFF:_WOBJ_OFF + O_FEAT, :]
    w_a   = packd_ref[_WA_OFF:_WA_OFF + NUM_ACT, :]
    pos   = packd_ref[_POS_OFF:_POS_OFF + 2 * N, :]                  # [2N, D]

    def vrow(i):
        return packd_ref[_VEC_OFF + i:_VEC_OFF + i + 1, :]           # [1, D]

    # --- lane-dense (width-128) MXU weights ---
    wqkvo = packw_ref[_WQKVO_OFF:_WQKVO_OFF + D, :]                  # [D, 4D]
    bqkv  = packw_ref[_BQKV_OFF:_BQKV_OFF + 1, :]                    # [1, 4D]
    w1    = packw_ref[_W1_OFF:_W1_OFF + D, :]                        # [D, H]
    bm1   = packw_ref[_BM1_OFF:_BM1_OFF + 1, :]                      # [1, H]
    w2t   = packw_ref[_W2T_OFF:_W2T_OFF + D, :]                      # [D, H]
    whp   = packw_ref[_WH_OFF:_WH_OFF + D, :]                        # [D, OUT_PAD]
    bhp   = packw_ref[_BH_OFF:_BH_OFF + 1, :]                        # [1, OUT_PAD]

    def layer_norm(h, g, bias):
        mu = jnp.mean(h, axis=-1, keepdims=True)
        var = jnp.mean(jnp.square(h - mu), axis=-1, keepdims=True)
        return (h - mu) * lax.rsqrt(var + LN_EPS) * g + bias

    # --- token embeddings: rows 0..N-1 = state tokens (b*T+t), N..2N-1 = action tokens ---
    s_tok = (jnp.dot(robot_ref[...], w_r, preferred_element_type=jnp.float32)
             + jnp.dot(obj_ref[...], w_obj, preferred_element_type=jnp.float32))   # [N, D]
    one_hot = jnp.where(
        act_ref[...] == lax.broadcasted_iota(jnp.int32, (N, NUM_ACT), 1),
        jnp.float32(1.0), jnp.float32(0.0))                                        # [N, A]
    a_tok = jnp.dot(one_hot, w_a, preferred_element_type=jnp.float32)              # [N, D]
    # positions (with per-token-type bias folded in at pack time)
    x = jnp.concatenate([s_tok, a_tok], axis=0) + pos                              # [2N, D]

    # --- pre-LN single-head causal self-attention (fused QKV+O weights) ---
    h1 = layer_norm(x, vrow(_V_G1), vrow(_V_B1))
    qkv = jnp.dot(h1, wqkvo, preferred_element_type=jnp.float32) + bqkv            # [2N, 4D]
    q = qkv[:, 0:D]
    k = qkv[:, D:2 * D]
    v = qkv[:, 2 * D:3 * D]
    scores = lax.dot_general(q, k, (((1,), (1,)), ((), ())),                       # q @ k^T
                             preferred_element_type=jnp.float32)                   # [2N, 2N]
    scores = scores * (D ** -0.5) + mask_ref[...]          # additive causal + batch-block mask
    scores = scores - jnp.max(scores, axis=-1, keepdims=True)
    p = jnp.exp(scores)
    p = p / jnp.sum(p, axis=-1, keepdims=True)
    attn = jnp.dot(p, v, preferred_element_type=jnp.float32)                       # [2N, D]
    w_o = wqkvo[:, 3 * D:4 * D]                                                    # [D, D]
    b_o = bqkv[:, 3 * D:4 * D]                                                     # [1, D]
    x = x + jnp.dot(attn, w_o, preferred_element_type=jnp.float32) + b_o

    # --- pre-LN GeLU MLP ---
    h2 = layer_norm(x, vrow(_V_G2), vrow(_V_B2))
    m = jnp.dot(h2, w1, preferred_element_type=jnp.float32) + bm1                  # [2N, H]
    # TODO(synk): PyTorch nn.GELU defaults to exact erf; tanh approximation used here.
    m = jax.nn.gelu(m, approximate=True)
    x = x + lax.dot_general(m, w2t, (((1,), (1,)), ((), ())),
                            preferred_element_type=jnp.float32) + vrow(_V_BM2)     # [2N, D]

    # --- final LN + action head on state-token rows only; lane-dense [N, 128] store ---
    hf = layer_norm(x[0:N, :], vrow(_V_G3), vrow(_V_B3))                           # [N, D]
    out_ref[...] = jnp.dot(hf, whp, preferred_element_type=jnp.float32) + bhp      # [N, 128]


# ----------------------------------- host-side packing -----------------------------------
def build_mask():
    """Additive mask [2N, 2N]: 0 where attention allowed, -1e30 otherwise.

    Row/col r < N is state token (b = r//T, t = r%T) at interleaved position 2t;
    r >= N is action token at position 2t+1. Allowed iff same batch and cpos <= rpos.
    """
    t_idx = np.arange(N) % T
    b_idx = np.arange(N) // T
    ppos = np.concatenate([2 * t_idx, 2 * t_idx + 1])
    bat = np.concatenate([b_idx, b_idx])
    allowed = (bat[:, None] == bat[None, :]) & (ppos[:, None] >= ppos[None, :])
    return jnp.asarray(np.where(allowed, 0.0, -1e30).astype(np.float32))


def pack_params(p):
    # batch-tiled positions with the per-token-type bias folded in
    pos_state = jnp.tile(p["pos"][0:T], (B, 1)) + p["bs"]          # [N, D]
    pos_action = jnp.tile(p["pos"][T:S], (B, 1)) + p["ba"]         # [N, D]
    vec = jnp.stack([p["g1"], p["b1"], p["g2"], p["b2"], p["g3"], p["b3"], p["bm2"],
                     jnp.zeros((D,), jnp.float32)], axis=0)        # [8, D]
    pack_d = jnp.concatenate(
        [p["w_r"], p["w_obj"], p["w_a"], pos_state, pos_action, vec], axis=0)
    assert pack_d.shape == (PACKD_ROWS, D)

    def pad_rows(a, rows):
        return jnp.concatenate(
            [a, jnp.zeros((rows - a.shape[0], a.shape[1]), jnp.float32)], axis=0)

    wqkvo = jnp.concatenate([p["w_q"], p["w_k"], p["w_v"], p["w_o"]], axis=1)   # [D, 4D]
    bqkv = jnp.concatenate([p["bq"], p["bk"], p["bv"], p["bo"]])[None, :]       # [1, 4D]
    whp = jnp.zeros((D, OUT_PAD), jnp.float32).at[:, :NUM_ACT].set(p["w_h"])
    bhp = jnp.zeros((1, OUT_PAD), jnp.float32).at[0, :NUM_ACT].set(p["bh"])
    pack_w = jnp.concatenate([
        wqkvo,                              # rows   0.. 31
        pad_rows(bqkv, 8),                  # rows  32.. 39
        p["w_1"],                           # rows  40.. 71
        pad_rows(p["bm1"][None, :], 8),     # rows  72.. 79
        p["w_2"].T,                         # rows  80..111
        whp,                                # rows 112..143
        pad_rows(bhp, 8),                   # rows 144..151
    ], axis=0)
    assert pack_w.shape == (PACKW_ROWS, H)

    return {"pack_d": pack_d, "pack_w": pack_w, "mask": build_mask()}


def init_params(key):
    ks = jax.random.split(key, 26)
    it = iter(ks)
    std = 0.02

    def w(shp):
        return jax.random.normal(next(it), shp, jnp.float32) * std

    def bias(shp):
        return jax.random.normal(next(it), shp, jnp.float32) * 0.01

    def gain(shp):
        return 1.0 + jax.random.normal(next(it), shp, jnp.float32) * 0.01

    raw = dict(
        w_r=w((R_FEAT, D)), w_obj=w((O_FEAT, D)), w_a=w((NUM_ACT, D)), pos=w((S, D)),
        bs=bias((D,)), ba=bias((D,)),
        w_q=w((D, D)), w_k=w((D, D)), w_v=w((D, D)), w_o=w((D, D)),
        bq=bias((D,)), bk=bias((D,)), bv=bias((D,)), bo=bias((D,)),
        w_1=w((D, H)), bm1=bias((H,)), w_2=w((H, D)), bm2=bias((D,)),
        w_h=w((D, NUM_ACT)), bh=bias((NUM_ACT,)),
        g1=gain((D,)), b1=bias((D,)), g2=gain((D,)), b2=bias((D,)), g3=gain((D,)), b3=bias((D,)),
    )
    return raw, pack_params(raw)


# ------------------------------------- wrapper -------------------------------------
@jax.jit
def dt_forward(robot, objects, actions, params):
    robot2 = robot.reshape(N, R_FEAT)
    obj2 = objects.reshape(N, O_FEAT)
    act2 = actions.reshape(N, 1).astype(jnp.int32)
    # Whole problem fits in VMEM: one grid-less invocation, full arrays resident.
    logits_pad = pl.pallas_call(
        dt_fused_kernel,
        out_shape=jax.ShapeDtypeStruct((N, OUT_PAD), jnp.float32),
    )(robot2, obj2, act2, params["mask"], params["pack_d"], params["pack_w"])
    # lane-dense kernel output -> slice the 8 real action lanes
    return logits_pad[:, :NUM_ACT].reshape(B, T, NUM_ACT)


# ---------------------------- pure-JAX reference (interleaved) ----------------------------
def dt_reference(robot, objects, actions, p):
    def ln(h, g, bias):
        mu = jnp.mean(h, axis=-1, keepdims=True)
        var = jnp.mean(jnp.square(h - mu), axis=-1, keepdims=True)
        return (h - mu) * lax.rsqrt(var + LN_EPS) * g + bias

    s = robot @ p["w_r"] + objects @ p["w_obj"] + p["bs"] + p["pos"][0:T]
    a = p["w_a"][actions] + p["ba"] + p["pos"][T:S]
    x = jnp.stack([s, a], axis=2).reshape(B, S, D)        # s_0, a_0, s_1, a_1, ...

    h1 = ln(x, p["g1"], p["b1"])
    q = h1 @ p["w_q"] + p["bq"]
    k = h1 @ p["w_k"] + p["bk"]
    v = h1 @ p["w_v"] + p["bv"]
    sc = jnp.einsum("bqd,bkd->bqk", q, k) * (D ** -0.5)
    causal = jnp.tril(jnp.ones((S, S), bool))
    sc = jnp.where(causal, sc, -1e30)
    pr = jax.nn.softmax(sc, axis=-1)
    x = x + jnp.einsum("bqk,bkd->bqd", pr, v) @ p["w_o"] + p["bo"]

    h2 = ln(x, p["g2"], p["b2"])
    m = jax.nn.gelu(h2 @ p["w_1"] + p["bm1"], approximate=True)
    x = x + m @ p["w_2"] + p["bm2"]

    hf = ln(x[:, 0::2, :], p["g3"], p["b3"])               # state tokens (even positions)
    return hf @ p["w_h"] + p["bh"]


# --------------------------------------- main ---------------------------------------
if __name__ == "__main__":
    key = jax.random.PRNGKey(0)
    k_p, k_r, k_o, k_a = jax.random.split(key, 4)

    raw_params, packed_params = init_params(k_p)
    robot_tensors = jax.random.normal(k_r, (B, T, R_FEAT), jnp.float32)
    object_tensors = jax.random.normal(k_o, (B, T, O_FEAT), jnp.float32)
    actions = jax.random.randint(k_a, (B, T), 0, NUM_ACT, dtype=jnp.int32)

    logits = dt_forward(robot_tensors, object_tensors, actions, packed_params)
    jax.block_until_ready(logits)

    assert logits.shape == (B, T, NUM_ACT) and logits.dtype == jnp.float32
    assert bool(jnp.all(jnp.isfinite(logits)))

    with jax.default_matmul_precision("highest"):
        ref = dt_reference(robot_tensors, object_tensors, actions, raw_params)
    max_err = float(jnp.max(jnp.abs(logits - ref)))
    assert bool(jnp.allclose(logits, ref, rtol=5e-3, atol=5e-4)), max_err

    print("KERNEL_OK")
</pallas_src>

<mosaic_0001>
module attributes {stable_mosaic.version = 11 : i64} {
  func.func @dt_fused_kernel(%arg0: memref<16x16xf32, #tpu.memory_space<vmem>>, %arg1: memref<16x24xf32, #tpu.memory_space<vmem>>, %arg2: memref<16x1xi32, #tpu.memory_space<vmem>>, %arg3: memref<32x32xf32, #tpu.memory_space<vmem>>, %arg4: memref<88x32xf32, #tpu.memory_space<vmem>>, %arg5: memref<152x128xf32, #tpu.memory_space<vmem>>, %arg6: memref<16x128xf32, #tpu.memory_space<vmem>>) attributes {dimension_semantics = [], scalar_prefetch = 0 : i64, scratch_operands = 0 : i64, tpu.core_type = #tpu.core_type<tc>} {
    %c0 = arith.constant 0 : index
    %c0_0 = arith.constant 0 : index
    %0 = vector.load %arg4[%c0, %c0_0] : memref<88x32xf32, #tpu.memory_space<vmem>>, vector<16x32xf32>
    %c16 = arith.constant 16 : index
    %c0_1 = arith.constant 0 : index
    %1 = vector.load %arg4[%c16, %c0_1] : memref<88x32xf32, #tpu.memory_space<vmem>>, vector<24x32xf32>
    %c40 = arith.constant 40 : index
    %c0_2 = arith.constant 0 : index
    %2 = vector.load %arg4[%c40, %c0_2] : memref<88x32xf32, #tpu.memory_space<vmem>>, vector<8x32xf32>
    %c48 = arith.constant 48 : index
    %c0_3 = arith.constant 0 : index
    %3 = vector.load %arg4[%c48, %c0_3] : memref<88x32xf32, #tpu.memory_space<vmem>>, vector<32x32xf32>
    %c0_4 = arith.constant 0 : index
    %c0_5 = arith.constant 0 : index
    %4 = vector.load %arg5[%c0_4, %c0_5] : memref<152x128xf32, #tpu.memory_space<vmem>>, vector<32x128xf32>
    %c32 = arith.constant 32 : index
    %c0_6 = arith.constant 0 : index
    %5 = vector.load %arg5[%c32, %c0_6] : memref<152x128xf32, #tpu.memory_space<vmem>>, vector<1x128xf32>
    %c40_7 = arith.constant 40 : index
    %c0_8 = arith.constant 0 : index
    %6 = vector.load %arg5[%c40_7, %c0_8] : memref<152x128xf32, #tpu.memory_space<vmem>>, vector<32x128xf32>
    %c72 = arith.constant 72 : index
    %c0_9 = arith.constant 0 : index
    %7 = vector.load %arg5[%c72, %c0_9] : memref<152x128xf32, #tpu.memory_space<vmem>>, vector<1x128xf32>
    %c80 = arith.constant 80 : index
    %c0_10 = arith.constant 0 : index
    %8 = vector.load %arg5[%c80, %c0_10] : memref<152x128xf32, #tpu.memory_space<vmem>>, vector<32x128xf32>
    %c112 = arith.constant 112 : index
    %c0_11 = arith.constant 0 : index
    %9 = vector.load %arg5[%c112, %c0_11] : memref<152x128xf32, #tpu.memory_space<vmem>>, vector<32x128xf32>
    %c144 = arith.constant 144 : index
    %c0_12 = arith.constant 0 : index
    %10 = vector.load %arg5[%c144, %c0_12] : memref<152x128xf32, #tpu.memory_space<vmem>>, vector<1x128xf32>
    %c0_13 = arith.constant 0 : index
    %c0_14 = arith.constant 0 : index
    %11 = vector.load %arg0[%c0_13, %c0_14] : memref<16x16xf32, #tpu.memory_space<vmem>>, vector<16x16xf32>
    %cst = arith.constant dense<0.000000e+00> : vector<16x32xf32>
    %12 = tpu.matmul %11, %0, %cst {dimension_numbers = #tpu.dot_dimension_numbers<[1], [0], [0], [1], [0, 0, 1, 1], [], []>} : vector<16x16xf32>, vector<16x32xf32>, vector<16x32xf32> -> vector<16x32xf32>
    %c0_15 = arith.constant 0 : index
    %c0_16 = arith.constant 0 : index
    %13 = vector.load %arg1[%c0_15, %c0_16] : memref<16x24xf32, #tpu.memory_space<vmem>>, vector<16x24xf32>
    %cst_17 = arith.constant dense<0.000000e+00> : vector<16x32xf32>
    %14 = tpu.matmul %13, %1, %cst_17 {dimension_numbers = #tpu.dot_dimension_numbers<[1], [0], [0], [1], [0, 0, 1, 1], [], []>} : vector<16x24xf32>, vector<24x32xf32>, vector<16x32xf32> -> vector<16x32xf32>
    %15 = arith.addf %12, %14 : vector<16x32xf32>
    %c0_18 = arith.constant 0 : index
    %c0_19 = arith.constant 0 : index
    %16 = vector.load %arg2[%c0_18, %c0_19] : memref<16x1xi32, #tpu.memory_space<vmem>>, vector<16x1xi32>
    %17 = tpu.iota {dimensions = array<i32: 1>} : vector<16x8xi32>
    %18 = vector.broadcast %16 : vector<16x1xi32> to vector<16x8xi32>
    %19 = arith.cmpi eq, %18, %17 : vector<16x8xi32>
    %cst_20 = arith.constant 1.000000e+00 : f32
    %cst_21 = arith.constant 0.000000e+00 : f32
    %20 = vector.broadcast %cst_20 : f32 to vector<16x8xf32>
    %21 = vector.broadcast %cst_21 : f32 to vector<16x8xf32>
    %22 = arith.select %19, %20, %21 : vector<16x8xi1>, vector<16x8xf32>
    %cst_22 = arith.constant dense<0.000000e+00> : vector<16x32xf32>
    %23 = tpu.matmul %22, %2, %cst_22 {dimension_numbers = #tpu.dot_dimension_numbers<[1], [0], [0], [1], [0, 0, 1, 1], [], []>} : vector<16x8xf32>, vector<8x32xf32>, vector<16x32xf32> -> vector<16x32xf32>
    %24 = tpu.concatenate %15, %23 in 0 : vector<16x32xf32>, vector<16x32xf32> -> vector<32x32xf32>
    %25 = arith.addf %24, %3 : vector<32x32xf32>
    %c80_23 = arith.constant 80 : index
    %c0_24 = arith.constant 0 : index
    %26 = vector.load %arg4[%c80_23, %c0_24] : memref<88x32xf32, #tpu.memory_space<vmem>>, vector<1x32xf32>
    %c81 = arith.constant 81 : index
    %c0_25 = arith.constant 0 : index
    %27 = vector.load %arg4[%c81, %c0_25] : memref<88x32xf32, #tpu.memory_space<vmem>>, vector<1x32xf32>
    %cst_26 = arith.constant dense<0.000000e+00> : vector<32xf32>
    %28 = vector.multi_reduction <add>, %25, %cst_26 [1] : vector<32x32xf32> to vector<32xf32>
    %29 = vector.shape_cast %28 : vector<32xf32> to vector<32x1xf32>
    %cst_27 = arith.constant 3.200000e+01 : f32
    %30 = vector.broadcast %cst_27 : f32 to vector<32x1xf32>
    %31 = arith.divf %29, %30 : vector<32x1xf32>
    %32 = vector.broadcast %31 : vector<32x1xf32> to vector<32x32xf32>
    %33 = arith.subf %25, %32 : vector<32x32xf32>
    %34 = arith.mulf %33, %33 : vector<32x32xf32>
    %cst_28 = arith.constant dense<0.000000e+00> : vector<32xf32>
    %35 = vector.multi_reduction <add>, %34, %cst_28 [1] : vector<32x32xf32> to vector<32xf32>
    %36 = vector.shape_cast %35 : vector<32xf32> to vector<32x1xf32>
    %cst_29 = arith.constant 3.200000e+01 : f32
    %37 = vector.broadcast %cst_29 : f32 to vector<32x1xf32>
    %38 = arith.divf %36, %37 : vector<32x1xf32>
    %39 = vector.broadcast %31 : vector<32x1xf32> to vector<32x32xf32>
    %40 = arith.subf %25, %39 : vector<32x32xf32>
    %cst_30 = arith.constant 9.99999974E-6 : f32
    %41 = vector.broadcast %cst_30 : f32 to vector<32x1xf32>
    %42 = arith.addf %38, %41 : vector<32x1xf32>
    %43 = math.rsqrt %42 : vector<32x1xf32>
    %44 = vector.broadcast %43 : vector<32x1xf32> to vector<32x32xf32>
    %45 = arith.mulf %40, %44 : vector<32x32xf32>
    %46 = vector.broadcast %26 : vector<1x32xf32> to vector<32x32xf32>
    %47 = arith.mulf %45, %46 : vector<32x32xf32>
    %48 = vector.broadcast %27 : vector<1x32xf32> to vector<32x32xf32>
    %49 = arith.addf %47, %48 : vector<32x32xf32>
    %cst_31 = arith.constant dense<0.000000e+00> : vector<32x128xf32>
    %50 = tpu.matmul %49, %4, %cst_31 {dimension_numbers = #tpu.dot_dimension_numbers<[1], [0], [0], [1], [0, 0, 1, 1], [], []>} : vector<32x32xf32>, vector<32x128xf32>, vector<32x128xf32> -> vector<32x128xf32>
    %51 = vector.broadcast %5 : vector<1x128xf32> to vector<32x128xf32>
    %52 = arith.addf %50, %51 : vector<32x128xf32>
    %53 = vector.extract_strided_slice %52 {offsets = [0, 0], sizes = [32, 32], strides = [1, 1]} : vector<32x128xf32> to vector<32x32xf32>
    %54 = vector.extract_strided_slice %52 {offsets = [0, 32], sizes = [32, 32], strides = [1, 1]} : vector<32x128xf32> to vector<32x32xf32>
    %55 = vector.extract_strided_slice %52 {offsets = [0, 64], sizes = [32, 32], strides = [1, 1]} : vector<32x128xf32> to vector<32x32xf32>
    %cst_32 = arith.constant dense<0.000000e+00> : vector<32x32xf32>
    %56 = tpu.matmul %53, %54, %cst_32 {dimension_numbers = #tpu.dot_dimension_numbers<[1], [1], [0], [0], [0, 0, 1, 0], [], []>} : vector<32x32xf32>, vector<32x32xf32>, vector<32x32xf32> -> vector<32x32xf32>
    %cst_33 = arith.constant 0.176776692 : f32
    %57 = vector.broadcast %cst_33 : f32 to vector<32x32xf32>
    %58 = arith.mulf %56, %57 : vector<32x32xf32>
    %c0_34 = arith.constant 0 : index
    %c0_35 = arith.constant 0 : index
    %59 = vector.load %arg3[%c0_34, %c0_35] : memref<32x32xf32, #tpu.memory_space<vmem>>, vector<32x32xf32>
    %60 = arith.addf %58, %59 : vector<32x32xf32>
    %cst_36 = arith.constant dense<0xFF800000> : vector<32xf32>
    %61 = vector.multi_reduction <maximumf>, %60, %cst_36 [1] : vector<32x32xf32> to vector<32xf32>
    %62 = vector.shape_cast %61 : vector<32xf32> to vector<32x1xf32>
    %63 = vector.broadcast %62 : vector<32x1xf32> to vector<32x32xf32>
    %64 = arith.subf %60, %63 : vector<32x32xf32>
    %65 = math.exp %64 : vector<32x32xf32>
    %cst_37 = arith.constant dense<0.000000e+00> : vector<32xf32>
    %66 = vector.multi_reduction <add>, %65, %cst_37 [1] : vector<32x32xf32> to vector<32xf32>
    %67 = vector.shape_cast %66 : vector<32xf32> to vector<32x1xf32>
    %68 = vector.broadcast %67 : vector<32x1xf32> to vector<32x32xf32>
    %69 = arith.divf %65, %68 : vector<32x32xf32>
    %cst_38 = arith.constant dense<0.000000e+00> : vector<32x32xf32>
    %70 = tpu.matmul %69, %55, %cst_38 {dimension_numbers = #tpu.dot_dimension_numbers<[1], [0], [0], [1], [0, 0, 1, 1], [], []>} : vector<32x32xf32>, vector<32x32xf32>, vector<32x32xf32> -> vector<32x32xf32>
    %71 = vector.extract_strided_slice %4 {offsets = [0, 96], sizes = [32, 32], strides = [1, 1]} : vector<32x128xf32> to vector<32x32xf32>
    %72 = vector.extract_strided_slice %5 {offsets = [0, 96], sizes = [1, 32], strides = [1, 1]} : vector<1x128xf32> to vector<1x32xf32>
    %cst_39 = arith.constant dense<0.000000e+00> : vector<32x32xf32>
    %73 = tpu.matmul %70, %71, %cst_39 {dimension_numbers = #tpu.dot_dimension_numbers<[1], [0], [0], [1], [0, 0, 1, 1], [], []>} : vector<32x32xf32>, vector<32x32xf32>, vector<32x32xf32> -> vector<32x32xf32>
    %74 = arith.addf %25, %73 : vector<32x32xf32>
    %75 = vector.broadcast %72 : vector<1x32xf32> to vector<32x32xf32>
    %76 = arith.addf %74, %75 : vector<32x32xf32>
    %c82 = arith.constant 82 : index
    %c0_40 = arith.constant 0 : index
    %77 = vector.load %arg4[%c82, %c0_40] : memref<88x32xf32, #tpu.memory_space<vmem>>, vector<1x32xf32>
    %c83 = arith.constant 83 : index
    %c0_41 = arith.constant 0 : index
    %78 = vector.load %arg4[%c83, %c0_41] : memref<88x32xf32, #tpu.memory_space<vmem>>, vector<1x32xf32>
    %cst_42 = arith.constant dense<0.000000e+00> : vector<32xf32>
    %79 = vector.multi_reduction <add>, %76, %cst_42 [1] : vector<32x32xf32> to vector<32xf32>
    %80 = vector.shape_cast %79 : vector<32xf32> to vector<32x1xf32>
    %cst_43 = arith.constant 3.200000e+01 : f32
    %81 = vector.broadcast %cst_43 : f32 to vector<32x1xf32>
    %82 = arith.divf %80, %81 : vector<32x1xf32>
    %83 = vector.broadcast %82 : vector<32x1xf32> to vector<32x32xf32>
    %84 = arith.subf %76, %83 : vector<32x32xf32>
    %85 = arith.mulf %84, %84 : vector<32x32xf32>
    %cst_44 = arith.constant dense<0.000000e+00> : vector<32xf32>
    %86 = vector.multi_reduction <add>, %85, %cst_44 [1] : vector<32x32xf32> to vector<32xf32>
    %87 = vector.shape_cast %86 : vector<32xf32> to vector<32x1xf32>
    %cst_45 = arith.constant 3.200000e+01 : f32
    %88 = vector.broadcast %cst_45 : f32 to vector<32x1xf32>
    %89 = arith.divf %87, %88 : vector<32x1xf32>
    %90 = vector.broadcast %82 : vector<32x1xf32> to vector<32x32xf32>
    %91 = arith.subf %76, %90 : vector<32x32xf32>
    %cst_46 = arith.constant 9.99999974E-6 : f32
    %92 = vector.broadcast %cst_46 : f32 to vector<32x1xf32>
    %93 = arith.addf %89, %92 : vector<32x1xf32>
    %94 = math.rsqrt %93 : vector<32x1xf32>
    %95 = vector.broadcast %94 : vector<32x1xf32> to vector<32x32xf32>
    %96 = arith.mulf %91, %95 : vector<32x32xf32>
    %97 = vector.broadcast %77 : vector<1x32xf32> to vector<32x32xf32>
    %98 = arith.mulf %96, %97 : vector<32x32xf32>
    %99 = vector.broadcast %78 : vector<1x32xf32> to vector<32x32xf32>
    %100 = arith.addf %98, %99 : vector<32x32xf32>
    %cst_47 = arith.constant dense<0.000000e+00> : vector<32x128xf32>
    %101 = tpu.matmul %100, %6, %cst_47 {dimension_numbers = #tpu.dot_dimension_numbers<[1], [0], [0], [1], [0, 0, 1, 1], [], []>} : vector<32x32xf32>, vector<32x128xf32>, vector<32x128xf32> -> vector<32x128xf32>
    %102 = vector.broadcast %7 : vector<1x128xf32> to vector<32x128xf32>
    %103 = arith.addf %101, %102 : vector<32x128xf32>
    %104 = arith.mulf %103, %103 : vector<32x128xf32>
    %105 = arith.mulf %103, %104 : vector<32x128xf32>
    %cst_48 = arith.constant 4.471500e-02 : f32
    %106 = vector.broadcast %cst_48 : f32 to vector<32x128xf32>
    %107 = arith.mulf %106, %105 : vector<32x128xf32>
    %108 = arith.addf %103, %107 : vector<32x128xf32>
    %cst_49 = arith.constant 0.797884583 : f32
    %109 = vector.broadcast %cst_49 : f32 to vector<32x128xf32>
    %110 = arith.mulf %109, %108 : vector<32x128xf32>
    %111 = math.tanh %110 : vector<32x128xf32>
    %cst_50 = arith.constant 1.000000e+00 : f32
    %112 = vector.broadcast %cst_50 : f32 to vector<32x128xf32>
    %113 = arith.addf %112, %111 : vector<32x128xf32>
    %cst_51 = arith.constant 5.000000e-01 : f32
    %114 = vector.broadcast %cst_51 : f32 to vector<32x128xf32>
    %115 = arith.mulf %114, %113 : vector<32x128xf32>
    %116 = arith.mulf %103, %115 : vector<32x128xf32>
    %cst_52 = arith.constant dense<0.000000e+00> : vector<32x32xf32>
    %117 = tpu.matmul %116, %8, %cst_52 {dimension_numbers = #tpu.dot_dimension_numbers<[1], [1], [0], [0], [0, 0, 1, 0], [], []>} : vector<32x128xf32>, vector<32x128xf32>, vector<32x32xf32> -> vector<32x32xf32>
    %118 = arith.addf %76, %117 : vector<32x32xf32>
    %c86 = arith.constant 86 : index
    %c0_53 = arith.constant 0 : index
    %119 = vector.load %arg4[%c86, %c0_53] : memref<88x32xf32, #tpu.memory_space<vmem>>, vector<1x32xf32>
    %120 = vector.broadcast %119 : vector<1x32xf32> to vector<32x32xf32>
    %121 = arith.addf %118, %120 : vector<32x32xf32>
    %122 = vector.extract_strided_slice %121 {offsets = [0, 0], sizes = [16, 32], strides = [1, 1]} : vector<32x32xf32> to vector<16x32xf32>
    %c84 = arith.constant 84 : index
    %c0_54 = arith.constant 0 : index
    %123 = vector.load %arg4[%c84, %c0_54] : memref<88x32xf32, #tpu.memory_space<vmem>>, vector<1x32xf32>
    %c85 = arith.constant 85 : index
    %c0_55 = arith.constant 0 : index
    %124 = vector.load %arg4[%c85, %c0_55] : memref<88x32xf32, #tpu.memory_space<vmem>>, vector<1x32xf32>
    %cst_56 = arith.constant dense<0.000000e+00> : vector<16xf32>
    %125 = vector.multi_reduction <add>, %122, %cst_56 [1] : vector<16x32xf32> to vector<16xf32>
    %126 = vector.shape_cast %125 : vector<16xf32> to vector<16x1xf32>
    %cst_57 = arith.constant 3.200000e+01 : f32
    %127 = vector.broadcast %cst_57 : f32 to vector<16x1xf32>
    %128 = arith.divf %126, %127 : vector<16x1xf32>
    %129 = vector.broadcast %128 : vector<16x1xf32> to vector<16x32xf32>
    %130 = arith.subf %122, %129 : vector<16x32xf32>
    %131 = arith.mulf %130, %130 : vector<16x32xf32>
    %cst_58 = arith.constant dense<0.000000e+00> : vector<16xf32>
    %132 = vector.multi_reduction <add>, %131, %cst_58 [1] : vector<16x32xf32> to vector<16xf32>
    %133 = vector.shape_cast %132 : vector<16xf32> to vector<16x1xf32>
    %cst_59 = arith.constant 3.200000e+01 : f32
    %134 = vector.broadcast %cst_59 : f32 to vector<16x1xf32>
    %135 = arith.divf %133, %134 : vector<16x1xf32>
    %136 = vector.broadcast %128 : vector<16x1xf32> to vector<16x32xf32>
    %137 = arith.subf %122, %136 : vector<16x32xf32>
    %cst_60 = arith.constant 9.99999974E-6 : f32
    %138 = vector.broadcast %cst_60 : f32 to vector<16x1xf32>
    %139 = arith.addf %135, %138 : vector<16x1xf32>
    %140 = math.rsqrt %139 : vector<16x1xf32>
    %141 = vector.broadcast %140 : vector<16x1xf32> to vector<16x32xf32>
    %142 = arith.mulf %137, %141 : vector<16x32xf32>
    %143 = vector.broadcast %123 : vector<1x32xf32> to vector<16x32xf32>
    %144 = arith.mulf %142, %143 : vector<16x32xf32>
    %145 = vector.broadcast %124 : vector<1x32xf32> to vector<16x32xf32>
    %146 = arith.addf %144, %145 : vector<16x32xf32>
    %cst_61 = arith.constant dense<0.000000e+00> : vector<16x128xf32>
    %147 = tpu.matmul %146, %9, %cst_61 {dimension_numbers = #tpu.dot_dimension_numbers<[1], [0], [0], [1], [0, 0, 1, 1], [], []>} : vector<16x32xf32>, vector<32x128xf32>, vector<16x128xf32> -> vector<16x128xf32>
    %148 = vector.broadcast %10 : vector<1x128xf32> to vector<16x128xf32>
    %149 = arith.addf %147, %148 : vector<16x128xf32>
    %c0_62 = arith.constant 0 : index
    %c0_63 = arith.constant 0 : index
    %150 = vector.load %arg6[%c0_62, %c0_63] : memref<16x128xf32, #tpu.memory_space<vmem>>, vector<16x128xf32>
    tpu.vector_store %arg6[%c0_62, %c0_63], %149 {strides = array<i32>} : memref<16x128xf32, #tpu.memory_space<vmem>>, vector<16x128xf32>,
    return
  }
}

</mosaic_0001>

<llo_original>
// kernel: dt_forward.1
$region0: #{dt_forward.1}
  #allocation0 [shape = 'u32[]', space=smem, size = 0x4, offset = 0x4, fixed_abs, tag = 'smem constant byte address 0x4 - core index']
  #allocation1 [shape = 'u32[144,128]{1,0:T(1,128)}', space=vmem, size = 0x12000, scoped, tag = 'internal scratch']
  %s0 = inlined_call_operand.hbm [shape: f32[16,16], index: 0, kind: input, shape index: {}]
  %s1 = inlined_call_operand.hbm [shape: f32[16,24], index: 1, kind: input, shape index: {}]
  %s2 = inlined_call_operand.vmem [shape: s32[16,1], index: 2, kind: input, shape index: {}]
  %s3 = inlined_call_operand.hbm [shape: f32[32,32], index: 3, kind: input, shape index: {}]
  %s4 = inlined_call_operand.vmem [shape: f32[88,32], index: 4, kind: input, shape index: {}]
  %s5 = inlined_call_operand.vmem [shape: f32[152,128], index: 5, kind: input, shape index: {}]
  %s6 = inlined_call_operand.vmem [shape: f32[16,128], index: 6, kind: output, shape index: {}]
  %s7 = sld [smem:[#allocation0]]
  $region46: #{dt_forward.1} parent=0
    _
  %s9 = ssub.s32 1, %s7
  %s10 = scalar_select 0, %s9, %s7
  $region1: #{dt_forward.1} parent=0
    #allocation2 [shape = 'u8[8192]{0}', space=vmem, size = 0x2000, scoped, tag = 'input window, operand 0, single buffered']
    #allocation3 [shape = 's32[1]{0}', space=sflag, size = 0x4, scoped, tag = 'scoped memory for dt_forward.1']
    #allocation4 [shape = 'u8[8192]{0}', space=vmem, size = 0x2000, scoped, tag = 'input window, operand 1, single buffered']
    #allocation5 [shape = 's32[1]{0}', space=sflag, size = 0x4, scoped, tag = 'scoped memory for dt_forward.1']
    #allocation6 [shape = 'u8[16384]{0}', space=vmem, size = 0x4000, scoped, tag = 'input window, operand 3, single buffered']
    %11 = vsyncpa [#allocation3], 0
    %12 = vsyncpa [#allocation5], 0
    // Predicated region
    $region2: #{dt_forward.1} parent=1 // pred_check
      _
    $region3: #{dt_forward.1} parent=1 // pred_check_branch
      %14 = sbr.rel (0) target = $region5
    $region4: #{dt_forward.1} parent=1 // pred_region
      %s16 = ssub.s32 256, 256
      %17 = vsyncadd [#allocation3], %s16
      %s18 = sshll.u32 [#allocation2], 4
      %s19 = int_to_ptr.vmem [resolvable:$true] %s18
      %24 = dma.hbm_to_vmem [thread:$0]  %s0, 256, %s19, [#allocation3], 128, 128, 8
    $region5: #{dt_forward.1} parent=1 // pred_fallthru
      _
    // Predicated region
    $region6: #{dt_forward.1} parent=1 // pred_check
      _
    $region7: #{dt_forward.1} parent=1 // pred_check_branch
      %26 = sbr.rel (0) target = $region9
    $region8: #{dt_forward.1} parent=1 // pred_region
      %s28 = ssub.s32 256, 256
      %29 = vsyncadd [#allocation5], %s28
      %s30 = sshll.u32 [#allocation4], 4
      %s31 = int_to_ptr.vmem [resolvable:$true] %s30
      %36 = dma.hbm_to_vmem [thread:$0]  %s1, 256, %s31, [#allocation5], 128, 128, 8
    $region9: #{dt_forward.1} parent=1 // pred_fallthru
      _
    // Predicated region
    $region10: #{dt_forward.1} parent=1 // pred_check
      _
    $region11: #{dt_forward.1} parent=1 // pred_check_branch
      %38 = sbr.rel (0) target = $region13
    $region12: #{dt_forward.1} parent=1 // pred_region
      _
    $region13: #{dt_forward.1} parent=1 // pred_fallthru
      _
    // Predicated region
    $region14: #{dt_forward.1} parent=1 // pred_check
      _
    $region15: #{dt_forward.1} parent=1 // pred_check_branch
      %40 = sbr.rel (0) target = $region17
    $region16: #{dt_forward.1} parent=1 // pred_region
      %s42 = ssub.s32 512, 512
      %43 = vsyncadd [#allocation5], %s42
      %s44 = sshll.u32 [#allocation6], 4
      %s45 = int_to_ptr.vmem [resolvable:$true] %s44
      %50 = dma.hbm_to_vmem [thread:$0]  %s3, 512, %s45, [#allocation5], 128, 128, 8
    $region17: #{dt_forward.1} parent=1 // pred_fallthru
      _
    // Predicated region
    $region18: #{dt_forward.1} parent=1 // pred_check
      _
    $region19: #{dt_forward.1} parent=1 // pred_check_branch
      %52 = sbr.rel (0) target = $region21
    $region20: #{dt_forward.1} parent=1 // pred_region
      _
    $region21: #{dt_forward.1} parent=1 // pred_fallthru
      _
    // Predicated region
    $region22: #{dt_forward.1} parent=1 // pred_check
      _
    $region23: #{dt_forward.1} parent=1 // pred_check_branch
      %54 = sbr.rel (0) target = $region25
    $region24: #{dt_forward.1} parent=1 // pred_region
      _
    $region25: #{dt_forward.1} parent=1 // pred_fallthru
      _
    // Predicated region
    $region26: #{dt_forward.1} parent=1 // pred_check
      _
    $region27: #{dt_forward.1} parent=1 // pred_check_branch
      %56 = sbr.rel (0) target = $region29
    $region28: #{dt_forward.1} parent=1 // pred_region
      %57 = dma.done [#allocation3], 256
    $region29: #{dt_forward.1} parent=1 // pred_fallthru
      _
    // Predicated region
    $region30: #{dt_forward.1} parent=1 // pred_check
      _
    $region31: #{dt_forward.1} parent=1 // pred_check_branch
      %59 = sbr.rel (0) target = $region33
    $region32: #{dt_forward.1} parent=1 // pred_region
      %60 = dma.done [#allocation5], 256
    $region33: #{dt_forward.1} parent=1 // pred_fallthru
      _
    // Predicated region
    $region34: #{dt_forward.1} parent=1 // pred_check
      _
    $region35: #{dt_forward.1} parent=1 // pred_check_branch
      %62 = sbr.rel (0) target = $region37
    $region36: #{dt_forward.1} parent=1 // pred_region
      %63 = dma.done [#allocation5], 512
    $region37: #{dt_forward.1} parent=1 // pred_fallthru
      _
    %v64 = vld [vmem:[%s4] sm:$0xff]
    %v65 = vld [vmem:[%s4 + $0x8] sm:$0xff]
    %v66 = vld [vmem:[%s4 + $0x10] sm:$0xff]
    %v67 = vld [vmem:[%s4 + $0x18] sm:$0xff]
    %v68 = vld [vmem:[%s4 + $0x20] sm:$0xff]
    %v69 = vld [vmem:[%s4 + $0x28] sm:$0xff]
    %v70 = vld [vmem:[%s4 + $0x30] sm:$0xff]
    %v71 = vld [vmem:[%s4 + $0x38] sm:$0xff]
    %v72 = vld [vmem:[%s4 + $0x40] sm:$0xff]
    %v73 = vld [vmem:[%s4 + $0x48] sm:$0xff]
    %v74 = vld [vmem:[%s5] sm:$0xff]
    %v75 = vld [vmem:[%s5 + $0x8] sm:$0xff]
    %v76 = vld [vmem:[%s5 + $0x10] sm:$0xff]
    %v77 = vld [vmem:[%s5 + $0x18] sm:$0xff]
    %v78 = vld [vmem:[%s5 + $0x20] sm:$0x1]
    %v79 = vld [vmem:[%s5 + $0x28] sm:$0xff]
    %v80 = vld [vmem:[%s5 + $0x30] sm:$0xff]
    %v81 = vld [vmem:[%s5 + $0x38] sm:$0xff]
    %v82 = vld [vmem:[%s5 + $0x40] sm:$0xff]
    %v83 = vld [vmem:[%s5 + $0x48] sm:$0x1]
    %v84 = vld [vmem:[%s5 + $0x50] sm:$0xff]
    %v85 = vld [vmem:[%s5 + $0x58] sm:$0xff]
    %v86 = vld [vmem:[%s5 + $0x60] sm:$0xff]
    %v87 = vld [vmem:[%s5 + $0x68] sm:$0xff]
    %v88 = vld [vmem:[%s5 + $0x70] sm:$0xff]
    %v89 = vld [vmem:[%s5 + $0x78] sm:$0xff]
    %v90 = vld [vmem:[%s5 + $0x80] sm:$0xff]
    %v91 = vld [vmem:[%s5 + $0x88] sm:$0xff]
    %v92 = vld [vmem:[%s5 + $0x90] sm:$0x1]
    %v93 = vld [vmem:[#allocation2] sm:$0xff]
    %v94 = vld [vmem:[#allocation2 + $0x8] sm:$0xff]
    %v95 = vld [vmem:[#allocation4] sm:$0xff]
    %v96 = vld [vmem:[#allocation4 + $0x8] sm:$0xff]
    %vm97 = vcmask 195584
    %v99 = vsel %vm97, %v95, 0
    %v102 = vsel %vm97, %v96, 0
    %104 = vmatprep.subr.mxu0 0.0
    %105 = vmatpush1.msra.mxu0 %v66
    %106 = vmatprep.subr.mxu0 0.0
    %107 = vmatpush1.msra.mxu0 %v67
    %108 = vmatprep.subr.mxu0 0.0
    %109 = vmatpush1.msra.mxu0 %v68
    %110 = vmatprep.subr.mxu0 0.0
    %111 = vmatpush1.msra.mxu0 0.0
    %112 = vmatprep.subr.mxu0 0.0
    %113 = vmatpush1.msra.mxu0 0.0
    %114 = vmatprep.subr.mxu0 0.0
    %115 = vmatpush1.msra.mxu0 0.0
    %116 = vmatprep.subr.mxu0 0.0
    %117 = vmatpush1.msra.mxu0 0.0
    %118 = vmatprep.subr.mxu0 0.0
    %119 = vmatpush1.msra.mxu0 0.0
    %120 = vmatprep.subr.mxu0 0.0
    %121 = vmatpush1.msra.mxu0 0.0
    %122 = vmatprep.subr.mxu0 0.0
    %123 = vmatpush1.msra.mxu0 0.0
    %124 = vmatprep.subr.mxu0 0.0
    %125 = vmatpush1.msra.mxu0 0.0
    %126 = vmatprep.subr.mxu0 0.0
    %127 = vmatpush1.msra.mxu0 0.0
    %128 = vmatprep.subr.mxu0 0.0
    %129 = vmatpush1.msra.mxu0 0.0
    %130 = vmatprep.subr.mxu0 0.0
    %131 = vmatpush1.msra.mxu0 0.0
    %132 = vmatprep.subr.mxu0 0.0
    %133 = vmatpush1.msra.mxu0 0.0
    %134 = vmatprep.subr.mxu0 0.0
    %135 = vmatpush1.msra.mxu0 0.0
    %136 = vmatprep.subr.mxu0 0.0
    %137 = vmatpush1.msra.mxu0 0.0
    %138 = vmatprep.subr.mxu0 0.0
    %139 = vmatpush1.msra.mxu0 0.0
    %140 = vmatprep.subr.mxu0 0.0
    %141 = vmatpush1.msra.mxu0 0.0
    %142 = vmatprep.subr.mxu0 0.0
    %143 = vmatpush1.msra.mxu0 0.0
    %144 = vmatprep.subr.mxu0 0.0
    %145 = vmatpush1.msra.mxu0 0.0
    %146 = vmatprep.subr.mxu0 0.0
    %147 = vmatpush1.msra.mxu0 0.0
    %148 = vmatprep.subr.mxu0 0.0
    %149 = vmatpush1.msra.mxu0 0.0
    %150 = vmatprep.subr.mxu0 0.0
    %151 = vmatpush1.msra.mxu0 0.0
    %152 = vmatprep.subr.mxu0 0.0
    %153 = vmatpush1.msra.mxu0 0.0
    %154 = vmatprep.subr.mxu0 0.0
    %155 = vmatpush1.msra.mxu0 0.0
    %156 = vmatprep.subr.mxu0 0.0
    %157 = vmatpush1.msra.mxu0 0.0
    %158 = vmatprep.subr.mxu0 0.0
    %159 = vmatpush1.msra.mxu0 0.0
    %160 = vmatprep.subr.mxu0 0.0
    %161 = vmatpush1.msra.mxu0 0.0
    %162 = vmatprep.subr.mxu0 0.0
    %163 = vmatpush1.msra.mxu0 0.0
    %164 = vmatprep.subr.mxu0 0.0
    %165 = vmatpush1.msra.mxu0 0.0
    %166 = vmatprep.subr.mxu0 0.0
    %167 = vmatpush1.msra.mxu0 0.0
    %168 = vmatprep.mubr.f32.mxu0 0.0
    %169 = vmatmul.mubr.f32.gmra.mrb[0].mxu0 %v99
    %v170 = vpop.f32.mrb[0].mxu0
    %v171 = vadd.f32 0.0, %v170
    %v172 = vpop.f32.mrb[0].mxu0
    %173 = vmatprep.mubr.f32.mxu0 0.0
    %174 = vmatmul.mubr.f32.gmra.mrb[0].mxu0 %v102
    %v175 = vpop.f32.mrb[0].mxu0
    %v176 = vadd.f32 0.0, %v175
    %v177 = vpop.f32.mrb[0].mxu0
    %178 = vdwg.mxu0
    %vm179 = vcmask 130048
    %v181 = vsel %vm179, %v93, 0
    %v184 = vsel %vm179, %v94, 0
    %186 = vmatprep.subr.mxu0 0.0
    %187 = vmatpush1.msra.mxu0 %v64
    %188 = vmatprep.subr.mxu0 0.0
    %189 = vmatpush1.msra.mxu0 %v65
    %190 = vmatprep.subr.mxu0 0.0
    %191 = vmatpush1.msra.mxu0 0.0
    %192 = vmatprep.subr.mxu0 0.0
    %193 = vmatpush1.msra.mxu0 0.0
    %194 = vmatprep.subr.mxu0 0.0
    %195 = vmatpush1.msra.mxu0 0.0
    %196 = vmatprep.subr.mxu0 0.0
    %197 = vmatpush1.msra.mxu0 0.0
    %198 = vmatprep.subr.mxu0 0.0
    %199 = vmatpush1.msra.mxu0 0.0
    %200 = vmatprep.subr.mxu0 0.0
    %201 = vmatpush1.msra.mxu0 0.0
    %202 = vmatprep.subr.mxu0 0.0
    %203 = vmatpush1.msra.mxu0 0.0
    %204 = vmatprep.subr.mxu0 0.0
    %205 = vmatpush1.msra.mxu0 0.0
    %206 = vmatprep.subr.mxu0 0.0
    %207 = vmatpush1.msra.mxu0 0.0
    %208 = vmatprep.subr.mxu0 0.0
    %209 = vmatpush1.msra.mxu0 0.0
    %210 = vmatprep.subr.mxu0 0.0
    %211 = vmatpush1.msra.mxu0 0.0
    %212 = vmatprep.subr.mxu0 0.0
    %213 = vmatpush1.msra.mxu0 0.0
    %214 = vmatprep.subr.mxu0 0.0
    %215 = vmatpush1.msra.mxu0 0.0
    %216 = vmatprep.subr.mxu0 0.0
    %217 = vmatpush1.msra.mxu0 0.0
    %218 = vmatprep.subr.mxu0 0.0
    %219 = vmatpush1.msra.mxu0 0.0
    %220 = vmatprep.subr.mxu0 0.0
    %221 = vmatpush1.msra.mxu0 0.0
    %222 = vmatprep.subr.mxu0 0.0
    %223 = vmatpush1.msra.mxu0 0.0
    %224 = vmatprep.subr.mxu0 0.0
    %225 = vmatpush1.msra.mxu0 0.0
    %226 = vmatprep.subr.mxu0 0.0
    %227 = vmatpush1.msra.mxu0 0.0
    %228 = vmatprep.subr.mxu0 0.0
    %229 = vmatpush1.msra.mxu0 0.0
    %230 = vmatprep.subr.mxu0 0.0
    %231 = vmatpush1.msra.mxu0 0.0
    %232 = vmatprep.subr.mxu0 0.0
    %233 = vmatpush1.msra.mxu0 0.0
    %234 = vmatprep.subr.mxu0 0.0
    %235 = vmatpush1.msra.mxu0 0.0
    %236 = vmatprep.subr.mxu0 0.0
    %237 = vmatpush1.msra.mxu0 0.0
    %238 = vmatprep.subr.mxu0 0.0
    %239 = vmatpush1.msra.mxu0 0.0
    %240 = vmatprep.subr.mxu0 0.0
    %241 = vmatpush1.msra.mxu0 0.0
    %242 = vmatprep.subr.mxu0 0.0
    %243 = vmatpush1.msra.mxu0 0.0
    %244 = vmatprep.subr.mxu0 0.0
    %245 = vmatpush1.msra.mxu0 0.0
    %246 = vmatprep.subr.mxu0 0.0
    %247 = vmatpush1.msra.mxu0 0.0
    %248 = vmatprep.subr.mxu0 0.0
    %249 = vmatpush1.msra.mxu0 0.0
    %250 = vmatprep.mubr.f32.mxu0 0.0
    %251 = vmatmul.mubr.f32.gmra.mrb[0].mxu0 %v181
    %v252 = vpop.f32.mrb[0].mxu0
    %v253 = vadd.f32 %v171, %v252
    %v254 = vpop.f32.mrb[0].mxu0
    %255 = vmatprep.mubr.f32.mxu0 0.0
    %256 = vmatmul.mubr.f32.gmra.mrb[0].mxu0 %v184
    %v257 = vpop.f32.mrb[0].mxu0
    %v258 = vadd.f32 %v176, %v257
    %v259 = vpop.f32.mrb[0].mxu0
    %260 = vdwg.mxu0
    %v261 = vld [vmem:[%s2] sm:$0xff]
    %v262 = vld [vmem:[%s2 + $0x8] sm:$0xff]
    %v263 = vlaneseq
    %v264 = vand.u32 %v263, 127
    %265 = vset.pattern.permute.xlu0 0
    %266 = vperm.xlu0 %265, %v261
    %v267 = vpop.permute.xlu0 %266
    %268 = vset.pattern.permute.xlu0 0
    %269 = vperm.xlu0 %268, %v262
    %v270 = vpop.permute.xlu0 %269
    %vm271 = vcmp.eq.s32.totalorder %v267, %v264
    %vm272 = vcmp.eq.s32.totalorder %v270, %v264
    %v273 = vsel %vm271, 1.0, 0.0
    %v274 = vsel %vm272, 1.0, 0.0
    %vm275 = vcmask 64512
    %v277 = vsel %vm275, %v273, 0
    %v280 = vsel %vm275, %v274, 0
    %282 = vmatprep.subr.mxu0 0.0
    %283 = vmatpush1.msra.mxu0 %v69
    %284 = vmatprep.subr.mxu0 0.0
    %285 = vmatpush1.msra.mxu0 0.0
    %286 = vmatprep.subr.mxu0 0.0
    %287 = vmatpush1.msra.mxu0 0.0
    %288 = vmatprep.subr.mxu0 0.0
    %289 = vmatpush1.msra.mxu0 0.0
    %290 = vmatprep.subr.mxu0 0.0
    %291 = vmatpush1.msra.mxu0 0.0
    %292 = vmatprep.subr.mxu0 0.0
    %293 = vmatpush1.msra.mxu0 0.0
    %294 = vmatprep.subr.mxu0 0.0
    %295 = vmatpush1.msra.mxu0 0.0
    %296 = vmatprep.subr.mxu0 0.0
    %297 = vmatpush1.msra.mxu0 0.0
    %298 = vmatprep.subr.mxu0 0.0
    %299 = vmatpush1.msra.mxu0 0.0
    %300 = vmatprep.subr.mxu0 0.0
    %301 = vmatpush1.msra.mxu0 0.0
    %302 = vmatprep.subr.mxu0 0.0
    %303 = vmatpush1.msra.mxu0 0.0
    %304 = vmatprep.subr.mxu0 0.0
    %305 = vmatpush1.msra.mxu0 0.0
    %306 = vmatprep.subr.mxu0 0.0
    %307 = vmatpush1.msra.mxu0 0.0
    %308 = vmatprep.subr.mxu0 0.0
    %309 = vmatpush1.msra.mxu0 0.0
    %310 = vmatprep.subr.mxu0 0.0
    %311 = vmatpush1.msra.mxu0 0.0
    %312 = vmatprep.subr.mxu0 0.0
    %313 = vmatpush1.msra.mxu0 0.0
    %314 = vmatprep.subr.mxu0 0.0
    %315 = vmatpush1.msra.mxu0 0.0
    %316 = vmatprep.subr.mxu0 0.0
    %317 = vmatpush1.msra.mxu0 0.0
    %318 = vmatprep.subr.mxu0 0.0
    %319 = vmatpush1.msra.mxu0 0.0
    %320 = vmatprep.subr.mxu0 0.0
    %321 = vmatpush1.msra.mxu0 0.0
    %322 = vmatprep.subr.mxu0 0.0
    %323 = vmatpush1.msra.mxu0 0.0
    %324 = vmatprep.subr.mxu0 0.0
    %325 = vmatpush1.msra.mxu0 0.0
    %326 = vmatprep.subr.mxu0 0.0
    %327 = vmatpush1.msra.mxu0 0.0
    %328 = vmatprep.subr.mxu0 0.0
    %329 = vmatpush1.msra.mxu0 0.0
    %330 = vmatprep.subr.mxu0 0.0
    %331 = vmatpush1.msra.mxu0 0.0
    %332 = vmatprep.subr.mxu0 0.0
    %333 = vmatpush1.msra.mxu0 0.0
    %334 = vmatprep.subr.mxu0 0.0
    %335 = vmatpush1.msra.mxu0 0.0
    %336 = vmatprep.subr.mxu0 0.0
    %337 = vmatpush1.msra.mxu0 0.0
    %338 = vmatprep.subr.mxu0 0.0
    %339 = vmatpush1.msra.mxu0 0.0
    %340 = vmatprep.subr.mxu0 0.0
    %341 = vmatpush1.msra.mxu0 0.0
    %342 = vmatprep.subr.mxu0 0.0
    %343 = vmatpush1.msra.mxu0 0.0
    %344 = vmatprep.subr.mxu0 0.0
    %345 = vmatpush1.msra.mxu0 0.0
    %346 = vmatprep.mubr.f32.mxu0 0.0
    %347 = vmatmul.mubr.f32.gmra.mrb[0].mxu0 %v277
    %v348 = vpop.f32.mrb[0].mxu0
    %v349 = vadd.f32 0.0, %v348
    %v350 = vpop.f32.mrb[0].mxu0
    %351 = vmatprep.mubr.f32.mxu0 0.0
    %352 = vmatmul.mubr.f32.gmra.mrb[0].mxu0 %v280
    %v353 = vpop.f32.mrb[0].mxu0
    %v354 = vadd.f32 0.0, %v353
    %v355 = vpop.f32.mrb[0].mxu0
    %356 = vdwg.mxu0
    %v357 = vadd.f32 %v253, %v70
    %v358 = vadd.f32 %v258, %v71
    %v359 = vadd.f32 %v349, %v72
    %v360 = vadd.f32 %v354, %v73
    %v361 = vld [vmem:[%s4 + $0x50] sm:$0x1]
    %v362 = vld [vmem:[%s4 + $0x51] sm:$0x1]
    %vm363 = vcmask 261120
    %v364 = vsel %vm363, %v357, 0.0
    %365 = vadd.xlane.f32.xlu0 %v364
    %v366 = vpop.xlane.xlu0 %365
    %v367 = vsel %vm363, %v358, 0.0
    %368 = vadd.xlane.f32.xlu0 %v367
    %v369 = vpop.xlane.xlu0 %368
    %v370 = vsel %vm363, %v359, 0.0
    %371 = vadd.xlane.f32.xlu0 %v370
    %v372 = vpop.xlane.xlu0 %371
    %v373 = vsel %vm363, %v360, 0.0
    %374 = vadd.xlane.f32.xlu0 %v373
    %v375 = vpop.xlane.xlu0 %374
    %v376 = vrcp.pop 32.0
    %v377 = vmul.f32 %v366, %v376
    %v378 = vmul.f32 %v369, %v376
    %v379 = vmul.f32 %v372, %v376
    %v380 = vmul.f32 %v375, %v376
    %v381 = vsub.f32 %v357, %v377
    %v382 = vsub.f32 %v358, %v378
    %v383 = vsub.f32 %v359, %v379
    %v384 = vsub.f32 %v360, %v380
    %v385 = vmul.f32 %v381, %v381
    %v386 = vmul.f32 %v382, %v382
    %v387 = vmul.f32 %v383, %v383
    %v388 = vmul.f32 %v384, %v384
    %v389 = vsel %vm363, %v385, 0.0
    %390 = vadd.xlane.f32.xlu0 %v389
    %v391 = vpop.xlane.xlu0 %390
    %v392 = vsel %vm363, %v386, 0.0
    %393 = vadd.xlane.f32.xlu0 %v392
    %v394 = vpop.xlane.xlu0 %393
    %v395 = vsel %vm363, %v387, 0.0
    %396 = vadd.xlane.f32.xlu0 %v395
    %v397 = vpop.xlane.xlu0 %396
    %v398 = vsel %vm363, %v388, 0.0
    %399 = vadd.xlane.f32.xlu0 %v398
    %v400 = vpop.xlane.xlu0 %399
    %v401 = vmul.f32 %v391, %v376
    %v402 = vmul.f32 %v394, %v376
    %v403 = vmul.f32 %v397, %v376
    %v404 = vmul.f32 %v400, %v376
    %v405 = vadd.f32 %v401, 1e-05
    %v406 = vadd.f32 %v402, 1e-05
    %v407 = vadd.f32 %v403, 1e-05
    %v408 = vadd.f32 %v404, 1e-05
    %v409 = vrsqrt.pop %v405
    %v410 = vrsqrt.pop %v406
    %v411 = vrsqrt.pop %v407
    %v412 = vrsqrt.pop %v408
    %v413 = vmul.f32 %v381, %v409
    %v414 = vmul.f32 %v382, %v410
    %v415 = vmul.f32 %v383, %v411
    %v416 = vmul.f32 %v384, %v412
    %v417 = vlaneseq
    %v418 = vshrl.u32 %v417, 7
    %v419 = vsub.s32 0, %v418
    %v420 = vrot.slane %v361, %v419
    %v421 = vmul.f32 %v413, %v420
    %v422 = vmul.f32 %v414, %v420
    %v423 = vmul.f32 %v415, %v420
    %v424 = vmul.f32 %v416, %v420
    %v425 = vlaneseq
    %v426 = vshrl.u32 %v425, 7
    %v427 = vsub.s32 0, %v426
    %v428 = vrot.slane %v362, %v427
    %v429 = vadd.f32 %v421, %v428
    %v430 = vadd.f32 %v422, %v428
    %v431 = vadd.f32 %v423, %v428
    %v432 = vadd.f32 %v424, %v428
    %v433 = vlaneseq
    %v434 = vshrl.u32 %v433, 7
    %v435 = vsub.s32 0, %v434
    %v436 = vrot.slane %v78, %v435
    %v438 = vsel %vm363, %v429, 0
    %v441 = vsel %vm363, %v430, 0
    %v444 = vsel %vm363, %v431, 0
    %v447 = vsel %vm363, %v432, 0
    %449 = vmatprep.subr.mxu0 0.0
    %450 = vmatpush1.msra.mxu0 %v74
    %451 = vmatprep.subr.mxu0 0.0
    %452 = vmatpush1.msra.mxu0 %v75
    %453 = vmatprep.subr.mxu0 0.0
    %454 = vmatpush1.msra.mxu0 %v76
    %455 = vmatprep.subr.mxu0 0.0
    %456 = vmatpush1.msra.mxu0 %v77
    %457 = vmatprep.subr.mxu0 0.0
    %458 = vmatpush1.msra.mxu0 0.0
    %459 = vmatprep.subr.mxu0 0.0
    %460 = vmatpush1.msra.mxu0 0.0
    %461 = vmatprep.subr.mxu0 0.0
    %462 = vmatpush1.msra.mxu0 0.0
    %463 = vmatprep.subr.mxu0 0.0
    %464 = vmatpush1.msra.mxu0 0.0
    %465 = vmatprep.subr.mxu0 0.0
    %466 = vmatpush1.msra.mxu0 0.0
    %467 = vmatprep.subr.mxu0 0.0
    %468 = vmatpush1.msra.mxu0 0.0
    %469 = vmatprep.subr.mxu0 0.0
    %470 = vmatpush1.msra.mxu0 0.0
    %471 = vmatprep.subr.mxu0 0.0
    %472 = vmatpush1.msra.mxu0 0.0
    %473 = vmatprep.subr.mxu0 0.0
    %474 = vmatpush1.msra.mxu0 0.0
    %475 = vmatprep.subr.mxu0 0.0
    %476 = vmatpush1.msra.mxu0 0.0
    %477 = vmatprep.subr.mxu0 0.0
    %478 = vmatpush1.msra.mxu0 0.0
    %479 = vmatprep.subr.mxu0 0.0
    %480 = vmatpush1.msra.mxu0 0.0
    %481 = vmatprep.subr.mxu0 0.0
    %482 = vmatpush1.msra.mxu0 0.0
    %483 = vmatprep.subr.mxu0 0.0
    %484 = vmatpush1.msra.mxu0 0.0
    %485 = vmatprep.subr.mxu0 0.0
    %486 = vmatpush1.msra.mxu0 0.0
    %487 = vmatprep.subr.mxu0 0.0
    %488 = vmatpush1.msra.mxu0 0.0
    %489 = vmatprep.subr.mxu0 0.0
    %490 = vmatpush1.msra.mxu0 0.0
    %491 = vmatprep.subr.mxu0 0.0
    %492 = vmatpush1.msra.mxu0 0.0
    %493 = vmatprep.subr.mxu0 0.0
    %494 = vmatpush1.msra.mxu0 0.0
    %495 = vmatprep.subr.mxu0 0.0
    %496 = vmatpush1.msra.mxu0 0.0
    %497 = vmatprep.subr.mxu0 0.0
    %498 = vmatpush1.msra.mxu0 0.0
    %499 = vmatprep.subr.mxu0 0.0
    %500 = vmatpush1.msra.mxu0 0.0
    %501 = vmatprep.subr.mxu0 0.0
    %502 = vmatpush1.msra.mxu0 0.0
    %503 = vmatprep.subr.mxu0 0.0
    %504 = vmatpush1.msra.mxu0 0.0
    %505 = vmatprep.subr.mxu0 0.0
    %506 = vmatpush1.msra.mxu0 0.0
    %507 = vmatprep.subr.mxu0 0.0
    %508 = vmatpush1.msra.mxu0 0.0
    %509 = vmatprep.subr.mxu0 0.0
    %510 = vmatpush1.msra.mxu0 0.0
    %511 = vmatprep.subr.mxu0 0.0
    %512 = vmatpush1.msra.mxu0 0.0
    %513 = vmatprep.mubr.f32.mxu0 0.0
    %514 = vmatmul.mubr.f32.gmra.mrb[0].mxu0 %v438
    %v515 = vpop.f32.mrb[0].mxu0
    %v516 = vadd.f32 %v436, %v515
    %v517 = vpop.f32.mrb[0].mxu0
    %518 = vmatprep.mubr.f32.mxu0 0.0
    %519 = vmatmul.mubr.f32.gmra.mrb[0].mxu0 %v441
    %v520 = vpop.f32.mrb[0].mxu0
    %v521 = vadd.f32 %v436, %v520
    %v522 = vpop.f32.mrb[0].mxu0
    %523 = vmatprep.mubr.f32.mxu0 0.0
    %524 = vmatmul.mubr.f32.gmra.mrb[0].mxu0 %v444
    %v525 = vpop.f32.mrb[0].mxu0
    %v526 = vadd.f32 %v436, %v525
    %v527 = vpop.f32.mrb[0].mxu0
    %528 = vmatprep.mubr.f32.mxu0 0.0
    %529 = vmatmul.mubr.f32.gmra.mrb[0].mxu0 %v447
    %v530 = vpop.f32.mrb[0].mxu0
    %v531 = vadd.f32 %v436, %v530
    %v532 = vpop.f32.mrb[0].mxu0
    %533 = vdwg.mxu0
    %538 = vrot.lane.b32.xlu0 %v516, 96
    %v539 = vpop.permute.xlu0 %538
    %540 = vrot.lane.b32.xlu0 %v521, 96
    %v541 = vpop.permute.xlu0 %540
    %542 = vrot.lane.b32.xlu0 %v526, 96
    %v543 = vpop.permute.xlu0 %542
    %544 = vrot.lane.b32.xlu0 %v531, 96
    %v545 = vpop.permute.xlu0 %544
    %v546 = vsel %vm363, %v516, 0
    %v548 = vsel %vm363, %v521, 0
    %v550 = vsel %vm363, %v526, 0
    %v552 = vsel %vm363, %v531, 0
    %v554 = vsel %vm363, %v539, 0
    %v556 = vsel %vm363, %v541, 0
    %v558 = vsel %vm363, %v543, 0
    %v560 = vsel %vm363, %v545, 0
    %562 = vmatprep.subr.mxu0 0.0
    %563 = vmatpush1.xpose.msra.mxu0 %v554
    %564 = vmatprep.subr.mxu0 0.0
    %565 = vmatpush1.xpose.msra.mxu0 %v556
    %566 = vmatprep.subr.mxu0 0.0
    %567 = vmatpush1.xpose.msra.mxu0 %v558
    %568 = vmatprep.subr.mxu0 0.0
    %569 = vmatpush1.xpose.msra.mxu0 %v560
    %570 = vmatprep.subr.mxu0 0.0
    %571 = vmatpush1.xpose.msra.mxu0 0.0
    %572 = vmatprep.subr.mxu0 0.0
    %573 = vmatpush1.xpose.msra.mxu0 0.0
    %574 = vmatprep.subr.mxu0 0.0
    %575 = vmatpush1.xpose.msra.mxu0 0.0
    %576 = vmatprep.subr.mxu0 0.0
    %577 = vmatpush1.xpose.msra.mxu0 0.0
    %578 = vmatprep.subr.mxu0 0.0
    %579 = vmatpush1.xpose.msra.mxu0 0.0
    %580 = vmatprep.subr.mxu0 0.0
    %581 = vmatpush1.xpose.msra.mxu0 0.0
    %582 = vmatprep.subr.mxu0 0.0
    %583 = vmatpush1.xpose.msra.mxu0 0.0
    %584 = vmatprep.subr.mxu0 0.0
    %585 = vmatpush1.xpose.msra.mxu0 0.0
    %586 = vmatprep.subr.mxu0 0.0
    %587 = vmatpush1.xpose.msra.mxu0 0.0
    %588 = vmatprep.subr.mxu0 0.0
    %589 = vmatpush1.xpose.msra.mxu0 0.0
    %590 = vmatprep.subr.mxu0 0.0
    %591 = vmatpush1.xpose.msra.mxu0 0.0
    %592 = vmatprep.subr.mxu0 0.0
    %593 = vmatpush1.xpose.msra.mxu0 0.0
    %594 = vmatprep.subr.mxu0 0.0
    %595 = vmatpush1.xpose.msra.mxu0 0.0
    %596 = vmatprep.subr.mxu0 0.0
    %597 = vmatpush1.xpose.msra.mxu0 0.0
    %598 = vmatprep.subr.mxu0 0.0
    %599 = vmatpush1.xpose.msra.mxu0 0.0
    %600 = vmatprep.subr.mxu0 0.0
    %601 = vmatpush1.xpose.msra.mxu0 0.0
    %602 = vmatprep.subr.mxu0 0.0
    %603 = vmatpush1.xpose.msra.mxu0 0.0
    %604 = vmatprep.subr.mxu0 0.0
    %605 = vmatpush1.xpose.msra.mxu0 0.0
    %606 = vmatprep.subr.mxu0 0.0
    %607 = vmatpush1.xpose.msra.mxu0 0.0
    %608 = vmatprep.subr.mxu0 0.0
    %609 = vmatpush1.xpose.msra.mxu0 0.0
    %610 = vmatprep.subr.mxu0 0.0
    %611 = vmatpush1.xpose.msra.mxu0 0.0
    %612 = vmatprep.subr.mxu0 0.0
    %613 = vmatpush1.xpose.msra.mxu0 0.0
    %614 = vmatprep.subr.mxu0 0.0
    %615 = vmatpush1.xpose.msra.mxu0 0.0
    %616 = vmatprep.subr.mxu0 0.0
    %617 = vmatpush1.xpose.msra.mxu0 0.0
    %618 = vmatprep.subr.mxu0 0.0
    %619 = vmatpush1.xpose.msra.mxu0 0.0
    %620 = vmatprep.subr.mxu0 0.0
    %621 = vmatpush1.xpose.msra.mxu0 0.0
    %622 = vmatprep.subr.mxu0 0.0
    %623 = vmatpush1.xpose.msra.mxu0 0.0
    %624 = vmatprep.subr.mxu0 0.0
    %625 = vmatpush1.xpose.msra.mxu0 0.0
    %626 = vmatprep.mubr.f32.mxu0 0.0
    %627 = vmatmul.mubr.f32.gmra.mrb[0].mxu0 %v546
    %v628 = vpop.f32.mrb[0].mxu0
    %v629 = vadd.f32 0.0, %v628
    %v630 = vpop.f32.mrb[0].mxu0
    %631 = vmatprep.mubr.f32.mxu0 0.0
    %632 = vmatmul.mubr.f32.gmra.mrb[0].mxu0 %v548
    %v633 = vpop.f32.mrb[0].mxu0
    %v634 = vadd.f32 0.0, %v633
    %v635 = vpop.f32.mrb[0].mxu0
    %636 = vmatprep.mubr.f32.mxu0 0.0
    %637 = vmatmul.mubr.f32.gmra.mrb[0].mxu0 %v550
    %v638 = vpop.f32.mrb[0].mxu0
    %v639 = vadd.f32 0.0, %v638
    %v640 = vpop.f32.mrb[0].mxu0
    %641 = vmatprep.mubr.f32.mxu0 0.0
    %642 = vmatmul.mubr.f32.gmra.mrb[0].mxu0 %v552
    %v643 = vpop.f32.mrb[0].mxu0
    %v644 = vadd.f32 0.0, %v643
    %v645 = vpop.f32.mrb[0].mxu0
    %646 = vdwg.mxu0
    %v647 = vmul.f32 %v629, 0.17677669
    %v648 = vmul.f32 %v634, 0.17677669
    %v649 = vmul.f32 %v639, 0.17677669
    %v650 = vmul.f32 %v644, 0.17677669
    %v651 = vld [vmem:[#allocation6] sm:$0xff]
    %v652 = vld [vmem:[#allocation6 + $0x8] sm:$0xff]
    %v653 = vld [vmem:[#allocation6 + $0x10] sm:$0xff]
    %v654 = vld [vmem:[#allocation6 + $0x18] sm:$0xff]
    %v655 = vadd.f32 %v647, %v651
    %v656 = vadd.f32 %v648, %v652
    %v657 = vadd.f32 %v649, %v653
    %v658 = vadd.f32 %v650, %v654
    %v659 = vsel %vm363, %v655, -inf
    %660 = vmax.xlane.f32.xlu0 %v659
    %v661 = vpop.xlane.xlu0 %660
    %v662 = vsel %vm363, %v656, -inf
    %663 = vmax.xlane.f32.xlu0 %v662
    %v664 = vpop.xlane.xlu0 %663
    %v665 = vsel %vm363, %v657, -inf
    %666 = vmax.xlane.f32.xlu0 %v665
    %v667 = vpop.xlane.xlu0 %666
    %v668 = vsel %vm363, %v658, -inf
    %669 = vmax.xlane.f32.xlu0 %v668
    %v670 = vpop.xlane.xlu0 %669
    %v671 = vsub.f32 %v655, %v661
    %v672 = vsub.f32 %v656, %v664
    %v673 = vsub.f32 %v657, %v667
    %v674 = vsub.f32 %v658, %v670
    %v675 = vmul.f32 %v671, 1.442695
    %v676 = vpow.pop %v675
    %v677 = vmul.f32 %v672, 1.442695
    %v678 = vpow.pop %v677
    %v679 = vmul.f32 %v673, 1.442695
    %v680 = vpow.pop %v679
    %v681 = vmul.f32 %v674, 1.442695
    %v682 = vpow.pop %v681
    %v683 = vsel %vm363, %v676, 0.0
    %684 = vadd.xlane.f32.xlu0 %v683
    %v685 = vpop.xlane.xlu0 %684
    %v686 = vsel %vm363, %v678, 0.0
    %687 = vadd.xlane.f32.xlu0 %v686
    %v688 = vpop.xlane.xlu0 %687
    %v689 = vsel %vm363, %v680, 0.0
    %690 = vadd.xlane.f32.xlu0 %v689
    %v691 = vpop.xlane.xlu0 %690
    %v692 = vsel %vm363, %v682, 0.0
    %693 = vadd.xlane.f32.xlu0 %v692
    %v694 = vpop.xlane.xlu0 %693
    %v695 = vrcp.pop %v685
    %v696 = vmul.f32 %v676, %v695
    %v697 = vrcp.pop %v688
    %v698 = vmul.f32 %v678, %v697
    %v699 = vrcp.pop %v691
    %v700 = vmul.f32 %v680, %v699
    %v701 = vrcp.pop %v694
    %v702 = vmul.f32 %v682, %v701
    %703 = vrot.lane.b32.xlu0 %v516, 64
    %v704 = vpop.permute.xlu0 %703
    %705 = vrot.lane.b32.xlu0 %v521, 64
    %v706 = vpop.permute.xlu0 %705
    %707 = vrot.lane.b32.xlu0 %v526, 64
    %v708 = vpop.permute.xlu0 %707
    %709 = vrot.lane.b32.xlu0 %v531, 64
    %v710 = vpop.permute.xlu0 %709
    %v716 = vsel %vm363, %v696, 0
    %v719 = vsel %vm363, %v698, 0
    %v722 = vsel %vm363, %v700, 0
    %v725 = vsel %vm363, %v702, 0
    %727 = vmatprep.subr.mxu0 0.0
    %728 = vmatpush1.msra.mxu0 %v704
    %729 = vmatprep.subr.mxu0 0.0
    %730 = vmatpush1.msra.mxu0 %v706
    %731 = vmatprep.subr.mxu0 0.0
    %732 = vmatpush1.msra.mxu0 %v708
    %733 = vmatprep.subr.mxu0 0.0
    %734 = vmatpush1.msra.mxu0 %v710
    %735 = vmatprep.subr.mxu0 0.0
    %736 = vmatpush1.msra.mxu0 0.0
    %737 = vmatprep.subr.mxu0 0.0
    %738 = vmatpush1.msra.mxu0 0.0
    %739 = vmatprep.subr.mxu0 0.0
    %740 = vmatpush1.msra.mxu0 0.0
    %741 = vmatprep.subr.mxu0 0.0
    %742 = vmatpush1.msra.mxu0 0.0
    %743 = vmatprep.subr.mxu0 0.0
    %744 = vmatpush1.msra.mxu0 0.0
    %745 = vmatprep.subr.mxu0 0.0
    %746 = vmatpush1.msra.mxu0 0.0
    %747 = vmatprep.subr.mxu0 0.0
    %748 = vmatpush1.msra.mxu0 0.0
    %749 = vmatprep.subr.mxu0 0.0
    %750 = vmatpush1.msra.mxu0 0.0
    %751 = vmatprep.subr.mxu0 0.0
    %752 = vmatpush1.msra.mxu0 0.0
    %753 = vmatprep.subr.mxu0 0.0
    %754 = vmatpush1.msra.mxu0 0.0
    %755 = vmatprep.subr.mxu0 0.0
    %756 = vmatpush1.msra.mxu0 0.0
    %757 = vmatprep.subr.mxu0 0.0
    %758 = vmatpush1.msra.mxu0 0.0
    %759 = vmatprep.subr.mxu0 0.0
    %760 = vmatpush1.msra.mxu0 0.0
    %761 = vmatprep.subr.mxu0 0.0
    %762 = vmatpush1.msra.mxu0 0.0
    %763 = vmatprep.subr.mxu0 0.0
    %764 = vmatpush1.msra.mxu0 0.0
    %765 = vmatprep.subr.mxu0 0.0
    %766 = vmatpush1.msra.mxu0 0.0
    %767 = vmatprep.subr.mxu0 0.0
    %768 = vmatpush1.msra.mxu0 0.0
    %769 = vmatprep.subr.mxu0 0.0
    %770 = vmatpush1.msra.mxu0 0.0
    %771 = vmatprep.subr.mxu0 0.0
    %772 = vmatpush1.msra.mxu0 0.0
    %773 = vmatprep.subr.mxu0 0.0
    %774 = vmatpush1.msra.mxu0 0.0
    %775 = vmatprep.subr.mxu0 0.0
    %776 = vmatpush1.msra.mxu0 0.0
    %777 = vmatprep.subr.mxu0 0.0
    %778 = vmatpush1.msra.mxu0 0.0
    %779 = vmatprep.subr.mxu0 0.0
    %780 = vmatpush1.msra.mxu0 0.0
    %781 = vmatprep.subr.mxu0 0.0
    %782 = vmatpush1.msra.mxu0 0.0
    %783 = vmatprep.subr.mxu0 0.0
    %784 = vmatpush1.msra.mxu0 0.0
    %785 = vmatprep.subr.mxu0 0.0
    %786 = vmatpush1.msra.mxu0 0.0
    %787 = vmatprep.subr.mxu0 0.0
    %788 = vmatpush1.msra.mxu0 0.0
    %789 = vmatprep.subr.mxu0 0.0
    %790 = vmatpush1.msra.mxu0 0.0
    %791 = vmatprep.mubr.f32.mxu0 0.0
    %792 = vmatmul.mubr.f32.gmra.mrb[0].mxu0 %v716
    %v793 = vpop.f32.mrb[0].mxu0
    %v794 = vadd.f32 0.0, %v793
    %v795 = vpop.f32.mrb[0].mxu0
    %796 = vmatprep.mubr.f32.mxu0 0.0
    %797 = vmatmul.mubr.f32.gmra.mrb[0].mxu0 %v719
    %v798 = vpop.f32.mrb[0].mxu0
    %v799 = vadd.f32 0.0, %v798
    %v800 = vpop.f32.mrb[0].mxu0
    %801 = vmatprep.mubr.f32.mxu0 0.0
    %802 = vmatmul.mubr.f32.gmra.mrb[0].mxu0 %v722
    %v803 = vpop.f32.mrb[0].mxu0
    %v804 = vadd.f32 0.0, %v803
    %v805 = vpop.f32.mrb[0].mxu0
    %806 = vmatprep.mubr.f32.mxu0 0.0
    %807 = vmatmul.mubr.f32.gmra.mrb[0].mxu0 %v725
    %v808 = vpop.f32.mrb[0].mxu0
    %v809 = vadd.f32 0.0, %v808
    %v810 = vpop.f32.mrb[0].mxu0
    %811 = vdwg.mxu0
    %816 = vrot.lane.b32.xlu0 %v74, 32
    %v817 = vpop.permute.xlu0 %816
    %818 = vrot.lane.b32.xlu0 %v75, 32
    %v819 = vpop.permute.xlu0 %818
    %820 = vrot.lane.b32.xlu0 %v76, 32
    %v821 = vpop.permute.xlu0 %820
    %822 = vrot.lane.b32.xlu0 %v77, 32
    %v823 = vpop.permute.xlu0 %822
    %v829 = vsel %vm363, %v794, 0
    %v832 = vsel %vm363, %v799, 0
    %v835 = vsel %vm363, %v804, 0
    %v838 = vsel %vm363, %v809, 0
    %840 = vmatprep.subr.mxu0 0.0
    %841 = vmatpush1.msra.mxu0 %v817
    %842 = vmatprep.subr.mxu0 0.0
    %843 = vmatpush1.msra.mxu0 %v819
    %844 = vmatprep.subr.mxu0 0.0
    %845 = vmatpush1.msra.mxu0 %v821
    %846 = vmatprep.subr.mxu0 0.0
    %847 = vmatpush1.msra.mxu0 %v823
    %848 = vmatprep.subr.mxu0 0.0
    %849 = vmatpush1.msra.mxu0 0.0
    %850 = vmatprep.subr.mxu0 0.0
    %851 = vmatpush1.msra.mxu0 0.0
    %852 = vmatprep.subr.mxu0 0.0
    %853 = vmatpush1.msra.mxu0 0.0
    %854 = vmatprep.subr.mxu0 0.0
    %855 = vmatpush1.msra.mxu0 0.0
    %856 = vmatprep.subr.mxu0 0.0
    %857 = vmatpush1.msra.mxu0 0.0
    %858 = vmatprep.subr.mxu0 0.0
    %859 = vmatpush1.msra.mxu0 0.0
    %860 = vmatprep.subr.mxu0 0.0
    %861 = vmatpush1.msra.mxu0 0.0
    %862 = vmatprep.subr.mxu0 0.0
    %863 = vmatpush1.msra.mxu0 0.0
    %864 = vmatprep.subr.mxu0 0.0
    %865 = vmatpush1.msra.mxu0 0.0
    %866 = vmatprep.subr.mxu0 0.0
    %867 = vmatpush1.msra.mxu0 0.0
    %868 = vmatprep.subr.mxu0 0.0
    %869 = vmatpush1.msra.mxu0 0.0
    %870 = vmatprep.subr.mxu0 0.0
    %871 = vmatpush1.msra.mxu0 0.0
    %872 = vmatprep.subr.mxu0 0.0
    %873 = vmatpush1.msra.mxu0 0.0
    %874 = vmatprep.subr.mxu0 0.0
    %875 = vmatpush1.msra.mxu0 0.0
    %876 = vmatprep.subr.mxu0 0.0
    %877 = vmatpush1.msra.mxu0 0.0
    %878 = vmatprep.subr.mxu0 0.0
    %879 = vmatpush1.msra.mxu0 0.0
    %880 = vmatprep.subr.mxu0 0.0
    %881 = vmatpush1.msra.mxu0 0.0
    %882 = vmatprep.subr.mxu0 0.0
    %883 = vmatpush1.msra.mxu0 0.0
    %884 = vmatprep.subr.mxu0 0.0
    %885 = vmatpush1.msra.mxu0 0.0
    %886 = vmatprep.subr.mxu0 0.0
    %887 = vmatpush1.msra.mxu0 0.0
    %888 = vmatprep.subr.mxu0 0.0
    %889 = vmatpush1.msra.mxu0 0.0
    %890 = vmatprep.subr.mxu0 0.0
    %891 = vmatpush1.msra.mxu0 0.0
    %892 = vmatprep.subr.mxu0 0.0
    %893 = vmatpush1.msra.mxu0 0.0
    %894 = vmatprep.subr.mxu0 0.0
    %895 = vmatpush1.msra.mxu0 0.0
    %896 = vmatprep.subr.mxu0 0.0
    %897 = vmatpush1.msra.mxu0 0.0
    %898 = vmatprep.subr.mxu0 0.0
    %899 = vmatpush1.msra.mxu0 0.0
    %900 = vmatprep.subr.mxu0 0.0
    %901 = vmatpush1.msra.mxu0 0.0
    %902 = vmatprep.subr.mxu0 0.0
    %903 = vmatpush1.msra.mxu0 0.0
    %904 = vmatprep.mubr.f32.mxu0 0.0
    %905 = vmatmul.mubr.f32.gmra.mrb[0].mxu0 %v829
    %v906 = vpop.f32.mrb[0].mxu0
    %v907 = vadd.f32 0.0, %v906
    %v908 = vpop.f32.mrb[0].mxu0
    %909 = vmatprep.mubr.f32.mxu0 0.0
    %910 = vmatmul.mubr.f32.gmra.mrb[0].mxu0 %v832
    %v911 = vpop.f32.mrb[0].mxu0
    %v912 = vadd.f32 0.0, %v911
    %v913 = vpop.f32.mrb[0].mxu0
    %914 = vmatprep.mubr.f32.mxu0 0.0
    %915 = vmatmul.mubr.f32.gmra.mrb[0].mxu0 %v835
    %v916 = vpop.f32.mrb[0].mxu0
    %v917 = vadd.f32 0.0, %v916
    %v918 = vpop.f32.mrb[0].mxu0
    %919 = vmatprep.mubr.f32.mxu0 0.0
    %920 = vmatmul.mubr.f32.gmra.mrb[0].mxu0 %v838
    %v921 = vpop.f32.mrb[0].mxu0
    %v922 = vadd.f32 0.0, %v921
    %v923 = vpop.f32.mrb[0].mxu0
    %924 = vdwg.mxu0
    %v925 = vadd.f32 %v357, %v907
    %v926 = vadd.f32 %v358, %v912
    %v927 = vadd.f32 %v359, %v917
    %v928 = vadd.f32 %v360, %v922
    %930 = vrot.lane.b32.xlu0 %v436, 32
    %v931 = vpop.permute.xlu0 %930
    %v933 = vadd.f32 %v925, %v931
    %v934 = vadd.f32 %v926, %v931
    %v935 = vadd.f32 %v927, %v931
    %v936 = vadd.f32 %v928, %v931
    %v937 = vld [vmem:[%s4 + $0x52] sm:$0x1]
    %v938 = vld [vmem:[%s4 + $0x53] sm:$0x1]
    %v939 = vsel %vm363, %v933, 0.0
    %940 = vadd.xlane.f32.xlu0 %v939
    %v941 = vpop.xlane.xlu0 %940
    %v942 = vsel %vm363, %v934, 0.0
    %943 = vadd.xlane.f32.xlu0 %v942
    %v944 = vpop.xlane.xlu0 %943
    %v945 = vsel %vm363, %v935, 0.0
    %946 = vadd.xlane.f32.xlu0 %v945
    %v947 = vpop.xlane.xlu0 %946
    %v948 = vsel %vm363, %v936, 0.0
    %949 = vadd.xlane.f32.xlu0 %v948
    %v950 = vpop.xlane.xlu0 %949
    %v951 = vmul.f32 %v941, %v376
    %v952 = vmul.f32 %v944, %v376
    %v953 = vmul.f32 %v947, %v376
    %v954 = vmul.f32 %v950, %v376
    %v955 = vsub.f32 %v933, %v951
    %v956 = vsub.f32 %v934, %v952
    %v957 = vsub.f32 %v935, %v953
    %v958 = vsub.f32 %v936, %v954
    %v959 = vmul.f32 %v955, %v955
    %v960 = vmul.f32 %v956, %v956
    %v961 = vmul.f32 %v957, %v957
    %v962 = vmul.f32 %v958, %v958
    %v963 = vsel %vm363, %v959, 0.0
    %964 = vadd.xlane.f32.xlu0 %v963
    %v965 = vpop.xlane.xlu0 %964
    %v966 = vsel %vm363, %v960, 0.0
    %967 = vadd.xlane.f32.xlu0 %v966
    %v968 = vpop.xlane.xlu0 %967
    %v969 = vsel %vm363, %v961, 0.0
    %970 = vadd.xlane.f32.xlu0 %v969
    %v971 = vpop.xlane.xlu0 %970
    %v972 = vsel %vm363, %v962, 0.0
    %973 = vadd.xlane.f32.xlu0 %v972
    %v974 = vpop.xlane.xlu0 %973
    %v975 = vmul.f32 %v965, %v376
    %v976 = vmul.f32 %v968, %v376
    %v977 = vmul.f32 %v971, %v376
    %v978 = vmul.f32 %v974, %v376
    %v979 = vadd.f32 %v975, 1e-05
    %v980 = vadd.f32 %v976, 1e-05
    %v981 = vadd.f32 %v977, 1e-05
    %v982 = vadd.f32 %v978, 1e-05
    %v983 = vrsqrt.pop %v979
    %v984 = vrsqrt.pop %v980
    %v985 = vrsqrt.pop %v981
    %v986 = vrsqrt.pop %v982
    %v987 = vmul.f32 %v955, %v983
    %v988 = vmul.f32 %v956, %v984
    %v989 = vmul.f32 %v957, %v985
    %v990 = vmul.f32 %v958, %v986
    %v991 = vlaneseq
    %v992 = vshrl.u32 %v991, 7
    %v993 = vsub.s32 0, %v992
    %v994 = vrot.slane %v937, %v993
    %v995 = vmul.f32 %v987, %v994
    %v996 = vmul.f32 %v988, %v994
    %v997 = vmul.f32 %v989, %v994
    %v998 = vmul.f32 %v990, %v994
    %v999 = vlaneseq
    %v1000 = vshrl.u32 %v999, 7
    %v1001 = vsub.s32 0, %v1000
    %v1002 = vrot.slane %v938, %v1001
    %v1003 = vadd.f32 %v995, %v1002
    %v1004 = vadd.f32 %v996, %v1002
    %v1005 = vadd.f32 %v997, %v1002
    %v1006 = vadd.f32 %v998, %v1002
    %v1007 = vlaneseq
    %v1008 = vshrl.u32 %v1007, 7
    %v1009 = vsub.s32 0, %v1008
    %v1010 = vrot.slane %v83, %v1009
    %v1012 = vsel %vm363, %v1003, 0
    %v1015 = vsel %vm363, %v1004, 0
    %v1018 = vsel %vm363, %v1005, 0
    %v1021 = vsel %vm363, %v1006, 0
    %1023 = vmatprep.subr.mxu0 0.0
    %1024 = vmatpush1.msra.mxu0 %v79
    %1025 = vmatprep.subr.mxu0 0.0
    %1026 = vmatpush1.msra.mxu0 %v80
    %1027 = vmatprep.subr.mxu0 0.0
    %1028 = vmatpush1.msra.mxu0 %v81
    %1029 = vmatprep.subr.mxu0 0.0
    %1030 = vmatpush1.msra.mxu0 %v82
    %1031 = vmatprep.subr.mxu0 0.0
    %1032 = vmatpush1.msra.mxu0 0.0
    %1033 = vmatprep.subr.mxu0 0.0
    %1034 = vmatpush1.msra.mxu0 0.0
    %1035 = vmatprep.subr.mxu0 0.0
    %1036 = vmatpush1.msra.mxu0 0.0
    %1037 = vmatprep.subr.mxu0 0.0
    %1038 = vmatpush1.msra.mxu0 0.0
    %1039 = vmatprep.subr.mxu0 0.0
    %1040 = vmatpush1.msra.mxu0 0.0
    %1041 = vmatprep.subr.mxu0 0.0
    %1042 = vmatpush1.msra.mxu0 0.0
    %1043 = vmatprep.subr.mxu0 0.0
    %1044 = vmatpush1.msra.mxu0 0.0
    %1045 = vmatprep.subr.mxu0 0.0
    %1046 = vmatpush1.msra.mxu0 0.0
    %1047 = vmatprep.subr.mxu0 0.0
    %1048 = vmatpush1.msra.mxu0 0.0
    %1049 = vmatprep.subr.mxu0 0.0
    %1050 = vmatpush1.msra.mxu0 0.0
    %1051 = vmatprep.subr.mxu0 0.0
    %1052 = vmatpush1.msra.mxu0 0.0
    %1053 = vmatprep.subr.mxu0 0.0
    %1054 = vmatpush1.msra.mxu0 0.0
    %1055 = vmatprep.subr.mxu0 0.0
    %1056 = vmatpush1.msra.mxu0 0.0
    %1057 = vmatprep.subr.mxu0 0.0
    %1058 = vmatpush1.msra.mxu0 0.0
    %1059 = vmatprep.subr.mxu0 0.0
    %1060 = vmatpush1.msra.mxu0 0.0
    %1061 = vmatprep.subr.mxu0 0.0
    %1062 = vmatpush1.msra.mxu0 0.0
    %1063 = vmatprep.subr.mxu0 0.0
    %1064 = vmatpush1.msra.mxu0 0.0
    %1065 = vmatprep.subr.mxu0 0.0
    %1066 = vmatpush1.msra.mxu0 0.0
    %1067 = vmatprep.subr.mxu0 0.0
    %1068 = vmatpush1.msra.mxu0 0.0
    %1069 = vmatprep.subr.mxu0 0.0
    %1070 = vmatpush1.msra.mxu0 0.0
    %1071 = vmatprep.subr.mxu0 0.0
    %1072 = vmatpush1.msra.mxu0 0.0
    %1073 = vmatprep.subr.mxu0 0.0
    %1074 = vmatpush1.msra.mxu0 0.0
    %1075 = vmatprep.subr.mxu0 0.0
    %1076 = vmatpush1.msra.mxu0 0.0
    %1077 = vmatprep.subr.mxu0 0.0
    %1078 = vmatpush1.msra.mxu0 0.0
    %1079 = vmatprep.subr.mxu0 0.0
    %1080 = vmatpush1.msra.mxu0 0.0
    %1081 = vmatprep.subr.mxu0 0.0
    %1082 = vmatpush1.msra.mxu0 0.0
    %1083 = vmatprep.subr.mxu0 0.0
    %1084 = vmatpush1.msra.mxu0 0.0
    %1085 = vmatprep.subr.mxu0 0.0
    %1086 = vmatpush1.msra.mxu0 0.0
    %1087 = vmatprep.mubr.f32.mxu0 0.0
    %1088 = vmatmul.mubr.f32.gmra.mrb[0].mxu0 %v1012
    %v1089 = vpop.f32.mrb[0].mxu0
    %v1090 = vadd.f32 %v1010, %v1089
    %v1091 = vpop.f32.mrb[0].mxu0
    %1092 = vmatprep.mubr.f32.mxu0 0.0
    %1093 = vmatmul.mubr.f32.gmra.mrb[0].mxu0 %v1015
    %v1094 = vpop.f32.mrb[0].mxu0
    %v1095 = vadd.f32 %v1010, %v1094
    %v1096 = vpop.f32.mrb[0].mxu0
    %1097 = vmatprep.mubr.f32.mxu0 0.0
    %1098 = vmatmul.mubr.f32.gmra.mrb[0].mxu0 %v1018
    %v1099 = vpop.f32.mrb[0].mxu0
    %v1100 = vadd.f32 %v1010, %v1099
    %v1101 = vpop.f32.mrb[0].mxu0
    %1102 = vmatprep.mubr.f32.mxu0 0.0
    %1103 = vmatmul.mubr.f32.gmra.mrb[0].mxu0 %v1021
    %v1104 = vpop.f32.mrb[0].mxu0
    %v1105 = vadd.f32 %v1010, %v1104
    %v1106 = vpop.f32.mrb[0].mxu0
    %1107 = vdwg.mxu0
    %v1108 = vmul.f32 %v1090, %v1090
    %v1109 = vmul.f32 %v1095, %v1095
    %v1110 = vmul.f32 %v1100, %v1100
    %v1111 = vmul.f32 %v1105, %v1105
    %v1112 = vmul.f32 %v1090, %v1108
    %v1113 = vmul.f32 %v1095, %v1109
    %v1114 = vmul.f32 %v1100, %v1110
    %v1115 = vmul.f32 %v1105, %v1111
    %v1116 = vmul.f32 %v1112, 0.044715
    %v1117 = vmul.f32 %v1113, 0.044715
    %v1118 = vmul.f32 %v1114, 0.044715
    %v1119 = vmul.f32 %v1115, 0.044715
    %v1120 = vadd.f32 %v1090, %v1116
    %v1121 = vadd.f32 %v1095, %v1117
    %v1122 = vadd.f32 %v1100, %v1118
    %v1123 = vadd.f32 %v1105, %v1119
    %v1124 = vmul.f32 %v1120, 0.7978846
    %v1125 = vmul.f32 %v1121, 0.7978846
    %v1126 = vmul.f32 %v1122, 0.7978846
    %v1127 = vmul.f32 %v1123, 0.7978846
    %v1128 = vtanh.pop %v1124
    %v1129 = vtanh.pop %v1125
    %v1130 = vtanh.pop %v1126
    %v1131 = vtanh.pop %v1127
    %v1132 = vadd.f32 %v1128, 1.0
    %v1133 = vadd.f32 %v1129, 1.0
    %v1134 = vadd.f32 %v1130, 1.0
    %v1135 = vadd.f32 %v1131, 1.0
    %v1136 = vmul.f32 %v1132, 0.5
    %v1137 = vmul.f32 %v1133, 0.5
    %v1138 = vmul.f32 %v1134, 0.5
    %v1139 = vmul.f32 %v1135, 0.5
    %v1140 = vmul.f32 %v1090, %v1136
    %v1141 = vmul.f32 %v1095, %v1137
    %v1142 = vmul.f32 %v1100, %v1138
    %v1143 = vmul.f32 %v1105, %v1139
    %1144 = vmatprep.subr.mxu0 0.0
    %1145 = vmatpush1.xpose.msra.mxu0 %v84
    %1146 = vmatprep.subr.mxu0 0.0
    %1147 = vmatpush1.xpose.msra.mxu0 %v85
    %1148 = vmatprep.subr.mxu0 0.0
    %1149 = vmatpush1.xpose.msra.mxu0 %v86
    %1150 = vmatprep.subr.mxu0 0.0
    %1151 = vmatpush1.xpose.msra.mxu0 %v87
    %1152 = vmatprep.subr.mxu0 0.0
    %1153 = vmatpush1.xpose.msra.mxu0 0.0
    %1154 = vmatprep.subr.mxu0 0.0
    %1155 = vmatpush1.xpose.msra.mxu0 0.0
    %1156 = vmatprep.subr.mxu0 0.0
    %1157 = vmatpush1.xpose.msra.mxu0 0.0
    %1158 = vmatprep.subr.mxu0 0.0
    %1159 = vmatpush1.xpose.msra.mxu0 0.0
    %1160 = vmatprep.subr.mxu0 0.0
    %1161 = vmatpush1.xpose.msra.mxu0 0.0
    %1162 = vmatprep.subr.mxu0 0.0
    %1163 = vmatpush1.xpose.msra.mxu0 0.0
    %1164 = vmatprep.subr.mxu0 0.0
    %1165 = vmatpush1.xpose.msra.mxu0 0.0
    %1166 = vmatprep.subr.mxu0 0.0
    %1167 = vmatpush1.xpose.msra.mxu0 0.0
    %1168 = vmatprep.subr.mxu0 0.0
    %1169 = vmatpush1.xpose.msra.mxu0 0.0
    %1170 = vmatprep.subr.mxu0 0.0
    %1171 = vmatpush1.xpose.msra.mxu0 0.0
    %1172 = vmatprep.subr.mxu0 0.0
    %1173 = vmatpush1.xpose.msra.mxu0 0.0
    %1174 = vmatprep.subr.mxu0 0.0
    %1175 = vmatpush1.xpose.msra.mxu0 0.0
    %1176 = vmatprep.subr.mxu0 0.0
    %1177 = vmatpush1.xpose.msra.mxu0 0.0
    %1178 = vmatprep.subr.mxu0 0.0
    %1179 = vmatpush1.xpose.msra.mxu0 0.0
    %1180 = vmatprep.subr.mxu0 0.0
    %1181 = vmatpush1.xpose.msra.mxu0 0.0
    %1182 = vmatprep.subr.mxu0 0.0
    %1183 = vmatpush1.xpose.msra.mxu0 0.0
    %1184 = vmatprep.subr.mxu0 0.0
    %1185 = vmatpush1.xpose.msra.mxu0 0.0
    %1186 = vmatprep.subr.mxu0 0.0
    %1187 = vmatpush1.xpose.msra.mxu0 0.0
    %1188 = vmatprep.subr.mxu0 0.0
    %1189 = vmatpush1.xpose.msra.mxu0 0.0
    %1190 = vmatprep.subr.mxu0 0.0
    %1191 = vmatpush1.xpose.msra.mxu0 0.0
    %1192 = vmatprep.subr.mxu0 0.0
    %1193 = vmatpush1.xpose.msra.mxu0 0.0
    %1194 = vmatprep.subr.mxu0 0.0
    %1195 = vmatpush1.xpose.msra.mxu0 0.0
    %1196 = vmatprep.subr.mxu0 0.0
    %1197 = vmatpush1.xpose.msra.mxu0 0.0
    %1198 = vmatprep.subr.mxu0 0.0
    %1199 = vmatpush1.xpose.msra.mxu0 0.0
    %1200 = vmatprep.subr.mxu0 0.0
    %1201 = vmatpush1.xpose.msra.mxu0 0.0
    %1202 = vmatprep.subr.mxu0 0.0
    %1203 = vmatpush1.xpose.msra.mxu0 0.0
    %1204 = vmatprep.subr.mxu0 0.0
    %1205 = vmatpush1.xpose.msra.mxu0 0.0
    %1206 = vmatprep.subr.mxu0 0.0
    %1207 = vmatpush1.xpose.msra.mxu0 0.0
    %1208 = vmatprep.mubr.f32.mxu0 0.0
    %1209 = vmatmul.mubr.f32.gmra.mrb[0].mxu0 %v1140
    %v1210 = vpop.f32.mrb[0].mxu0
    %v1211 = vadd.f32 0.0, %v1210
    %v1212 = vpop.f32.mrb[0].mxu0
    %1213 = vmatprep.mubr.f32.mxu0 0.0
    %1214 = vmatmul.mubr.f32.gmra.mrb[0].mxu0 %v1141
    %v1215 = vpop.f32.mrb[0].mxu0
    %v1216 = vadd.f32 0.0, %v1215
    %v1217 = vpop.f32.mrb[0].mxu0
    %1218 = vmatprep.mubr.f32.mxu0 0.0
    %1219 = vmatmul.mubr.f32.gmra.mrb[0].mxu0 %v1142
    %v1220 = vpop.f32.mrb[0].mxu0
    %v1221 = vpop.f32.mrb[0].mxu0
    %1222 = vmatprep.mubr.f32.mxu0 0.0
    %1223 = vmatmul.mubr.f32.gmra.mrb[0].mxu0 %v1143
    %v1224 = vpop.f32.mrb[0].mxu0
    %v1225 = vpop.f32.mrb[0].mxu0
    %1226 = vdwg.mxu0
    %v1227 = vadd.f32 %v933, %v1211
    %v1228 = vadd.f32 %v934, %v1216
    %v1229 = vld [vmem:[%s4 + $0x56] sm:$0x1]
    %v1230 = vlaneseq
    %v1231 = vshrl.u32 %v1230, 7
    %v1232 = vsub.s32 0, %v1231
    %v1233 = vrot.slane %v1229, %v1232
    %v1234 = vadd.f32 %v1227, %v1233
    %v1235 = vadd.f32 %v1228, %v1233
    %v1236 = vld [vmem:[%s4 + $0x54] sm:$0x1]
    %v1237 = vld [vmem:[%s4 + $0x55] sm:$0x1]
    %v1238 = vsel %vm363, %v1234, 0.0
    %1239 = vadd.xlane.f32.xlu0 %v1238
    %v1240 = vpop.xlane.xlu0 %1239
    %v1241 = vsel %vm363, %v1235, 0.0
    %1242 = vadd.xlane.f32.xlu0 %v1241
    %v1243 = vpop.xlane.xlu0 %1242
    %v1244 = vmul.f32 %v1240, %v376
    %v1245 = vmul.f32 %v1243, %v376
    %v1246 = vsub.f32 %v1234, %v1244
    %v1247 = vsub.f32 %v1235, %v1245
    %v1248 = vmul.f32 %v1246, %v1246
    %v1249 = vmul.f32 %v1247, %v1247
    %v1250 = vsel %vm363, %v1248, 0.0
    %1251 = vadd.xlane.f32.xlu0 %v1250
    %v1252 = vpop.xlane.xlu0 %1251
    %v1253 = vsel %vm363, %v1249, 0.0
    %1254 = vadd.xlane.f32.xlu0 %v1253
    %v1255 = vpop.xlane.xlu0 %1254
    %v1256 = vmul.f32 %v1252, %v376
    %v1257 = vmul.f32 %v1255, %v376
    %v1258 = vadd.f32 %v1256, 1e-05
    %v1259 = vadd.f32 %v1257, 1e-05
    %v1260 = vrsqrt.pop %v1258
    %v1261 = vrsqrt.pop %v1259
    %v1262 = vmul.f32 %v1246, %v1260
    %v1263 = vmul.f32 %v1247, %v1261
    %v1264 = vlaneseq
    %v1265 = vshrl.u32 %v1264, 7
    %v1266 = vsub.s32 0, %v1265
    %v1267 = vrot.slane %v1236, %v1266
    %v1268 = vmul.f32 %v1262, %v1267
    %v1269 = vmul.f32 %v1263, %v1267
    %v1270 = vlaneseq
    %v1271 = vshrl.u32 %v1270, 7
    %v1272 = vsub.s32 0, %v1271
    %v1273 = vrot.slane %v1237, %v1272
    %v1274 = vadd.f32 %v1268, %v1273
    %v1275 = vadd.f32 %v1269, %v1273
    %v1276 = vlaneseq
    %v1277 = vshrl.u32 %v1276, 7
    %v1278 = vsub.s32 0, %v1277
    %v1279 = vrot.slane %v92, %v1278
    %v1281 = vsel %vm363, %v1274, 0
    %v1284 = vsel %vm363, %v1275, 0
    %1286 = vmatprep.subr.mxu0 0.0
    %1287 = vmatpush1.msra.mxu0 %v88
    %1288 = vmatprep.subr.mxu0 0.0
    %1289 = vmatpush1.msra.mxu0 %v89
    %1290 = vmatprep.subr.mxu0 0.0
    %1291 = vmatpush1.msra.mxu0 %v90
    %1292 = vmatprep.subr.mxu0 0.0
    %1293 = vmatpush1.msra.mxu0 %v91
    %1294 = vmatprep.subr.mxu0 0.0
    %1295 = vmatpush1.msra.mxu0 0.0
    %1296 = vmatprep.subr.mxu0 0.0
    %1297 = vmatpush1.msra.mxu0 0.0
    %1298 = vmatprep.subr.mxu0 0.0
    %1299 = vmatpush1.msra.mxu0 0.0
    %1300 = vmatprep.subr.mxu0 0.0
    %1301 = vmatpush1.msra.mxu0 0.0
    %1302 = vmatprep.subr.mxu0 0.0
    %1303 = vmatpush1.msra.mxu0 0.0
    %1304 = vmatprep.subr.mxu0 0.0
    %1305 = vmatpush1.msra.mxu0 0.0
    %1306 = vmatprep.subr.mxu0 0.0
    %1307 = vmatpush1.msra.mxu0 0.0
    %1308 = vmatprep.subr.mxu0 0.0
    %1309 = vmatpush1.msra.mxu0 0.0
    %1310 = vmatprep.subr.mxu0 0.0
    %1311 = vmatpush1.msra.mxu0 0.0
    %1312 = vmatprep.subr.mxu0 0.0
    %1313 = vmatpush1.msra.mxu0 0.0
    %1314 = vmatprep.subr.mxu0 0.0
    %1315 = vmatpush1.msra.mxu0 0.0
    %1316 = vmatprep.subr.mxu0 0.0
    %1317 = vmatpush1.msra.mxu0 0.0
    %1318 = vmatprep.subr.mxu0 0.0
    %1319 = vmatpush1.msra.mxu0 0.0
    %1320 = vmatprep.subr.mxu0 0.0
    %1321 = vmatpush1.msra.mxu0 0.0
    %1322 = vmatprep.subr.mxu0 0.0
    %1323 = vmatpush1.msra.mxu0 0.0
    %1324 = vmatprep.subr.mxu0 0.0
    %1325 = vmatpush1.msra.mxu0 0.0
    %1326 = vmatprep.subr.mxu0 0.0
    %1327 = vmatpush1.msra.mxu0 0.0
    %1328 = vmatprep.subr.mxu0 0.0
    %1329 = vmatpush1.msra.mxu0 0.0
    %1330 = vmatprep.subr.mxu0 0.0
    %1331 = vmatpush1.msra.mxu0 0.0
    %1332 = vmatprep.subr.mxu0 0.0
    %1333 = vmatpush1.msra.mxu0 0.0
    %1334 = vmatprep.subr.mxu0 0.0
    %1335 = vmatpush1.msra.mxu0 0.0
    %1336 = vmatprep.subr.mxu0 0.0
    %1337 = vmatpush1.msra.mxu0 0.0
    %1338 = vmatprep.subr.mxu0 0.0
    %1339 = vmatpush1.msra.mxu0 0.0
    %1340 = vmatprep.subr.mxu0 0.0
    %1341 = vmatpush1.msra.mxu0 0.0
    %1342 = vmatprep.subr.mxu0 0.0
    %1343 = vmatpush1.msra.mxu0 0.0
    %1344 = vmatprep.subr.mxu0 0.0
    %1345 = vmatpush1.msra.mxu0 0.0
    %1346 = vmatprep.subr.mxu0 0.0
    %1347 = vmatpush1.msra.mxu0 0.0
    %1348 = vmatprep.subr.mxu0 0.0
    %1349 = vmatpush1.msra.mxu0 0.0
    %1350 = vmatprep.mubr.f32.mxu0 0.0
    %1351 = vmatmul.mubr.f32.gmra.mrb[0].mxu0 %v1281
    %v1352 = vpop.f32.mrb[0].mxu0
    %v1353 = vadd.f32 %v1279, %v1352
    %v1354 = vpop.f32.mrb[0].mxu0
    %1355 = vmatprep.mubr.f32.mxu0 0.0
    %1356 = vmatmul.mubr.f32.gmra.mrb[0].mxu0 %v1284
    %v1357 = vpop.f32.mrb[0].mxu0
    %v1358 = vadd.f32 %v1279, %v1357
    %v1359 = vpop.f32.mrb[0].mxu0
    %1360 = vdwg.mxu0
    %1361 = vst [vmem:[%s6] sm:$0xff] %v1353
    %1362 = vst [vmem:[%s6 + $0x8] sm:$0xff] %v1358
    // Predicated region
    $region38: #{dt_forward.1} parent=1 // pred_check
      _
    $region39: #{dt_forward.1} parent=1 // pred_check_branch
      %1364 = sbr.rel (0) target = $region41
    $region40: #{dt_forward.1} parent=1 // pred_region
      _
    $region41: #{dt_forward.1} parent=1 // pred_fallthru
      _
    // Predicated region
    $region42: #{dt_forward.1} parent=1 // pred_check
      _
    $region43: #{dt_forward.1} parent=1 // pred_check_branch
      %1366 = sbr.rel (0) target = $region45
    $region44: #{dt_forward.1} parent=1 // pred_region
      _
    $region45: #{dt_forward.1} parent=1 // pred_fallthru
      _
    %1367 = vsyncpa [#allocation3], 1
    %1368 = vsyncpa [#allocation5], 1

</llo_original>
